<compile_context>
chip_gen: v7x
topology: tpu7x:2x2x1
jax: 0.10.0
libtpu: 0.0.40
codegen_flags: <defaults>
</compile_context>

<pallas_src>
import jax
import jax.numpy as jnp
from jax.experimental import pallas as pl
from jax.experimental.pallas import tpu as pltpu

_HIGHEST = jax.lax.Precision.HIGHEST


def mlp_kernel(x_ref, w1_ref, b1_ref, w2_ref, b2_ref, o_ref):
    x = x_ref[...]  # (tb, in_size) f32

    # Layer 1: Linear(in -> hidden) + Sigmoid.
    h = jnp.dot(x, w1_ref[...], precision=_HIGHEST,
                preferred_element_type=jnp.float32) + b1_ref[...]
    h = jax.nn.sigmoid(h)

    # Layer 2: Linear(hidden -> out).
    logits = jnp.dot(h, w2_ref[...], precision=_HIGHEST,
                     preferred_element_type=jnp.float32) + b2_ref[...]

    # Numerically stable softmax over the (narrow) feature axis; exact divide.
    m = jnp.max(logits, axis=-1, keepdims=True)
    e = jnp.exp(logits - m)
    o_ref[...] = e / jnp.sum(e, axis=-1, keepdims=True)


def _round_up(n, m):
    return ((n + m - 1) // m) * m


def _choose_tile(batch, tb):
    # Tile rows must be a multiple of 8; never bigger than the (rounded) batch.
    tb = max(8, min(_round_up(tb, 8), _round_up(batch, 8)))
    # On large batches keep >= 4 grid steps so both v7x TensorCores get work
    # (irrelevant on single-core v5e/v6e), but never shrink below 256 rows
    # (per-step overhead dominates below that).
    if batch >= 4 * 256:
        tb = min(tb, max(256, _round_up(-(-batch // 4), 8)))
    return tb


def mlp_forward(x, w1, b1, w2, b2, *, tb=1024):
    """x: (batch, in), w1: (in, hidden), b1: (1, hidden), w2: (hidden, out), b2: (1, out)."""
    batch, in_size = x.shape
    hidden = w1.shape[1]
    out_size = w2.shape[1]

    tb = _choose_tile(batch, tb)
    n_tiles = pl.cdiv(batch, tb)  # boundary block (if any) is masked by Pallas

    cost = pl.CostEstimate(
        flops=2 * batch * (in_size * hidden + hidden * out_size),
        transcendentals=batch * (hidden + out_size),  # sigmoid + exp
        bytes_accessed=4 * (batch * in_size + batch * out_size
                            + w1.size + b1.size + w2.size + b2.size),
    )

    return pl.pallas_call(
        mlp_kernel,
        out_shape=jax.ShapeDtypeStruct((batch, out_size), jnp.float32),
        grid=(n_tiles,),
        in_specs=[
            # x: one batch tile per grid step (auto double-buffered DMA).
            pl.BlockSpec((tb, in_size), lambda i: (i, 0)),
            # Weights / biases: full-array blocks, VMEM-resident across all steps.
            pl.BlockSpec(w1.shape, lambda i: (0, 0)),
            pl.BlockSpec(b1.shape, lambda i: (0, 0)),
            pl.BlockSpec(w2.shape, lambda i: (0, 0)),
            pl.BlockSpec(b2.shape, lambda i: (0, 0)),
        ],
        # Narrow, real-width output: (tb, out_size) partial-lane stores cost far
        # less than the padded 128-wide HBM writeback they replace.
        out_specs=pl.BlockSpec((tb, out_size), lambda i: (i, 0)),
        compiler_params=pltpu.CompilerParams(dimension_semantics=("parallel",)),
        cost_estimate=cost,
    )(x, w1, b1, w2, b2)


def init_params(key, input_size=4, hidden_size=16, output_size=3):
    # PyTorch-like uniform(-1/sqrt(fan_in), 1/sqrt(fan_in)) init.
    k1, k2, k3, k4 = jax.random.split(key, 4)
    bound1 = 1.0 / jnp.sqrt(input_size)
    bound2 = 1.0 / jnp.sqrt(hidden_size)
    w1 = jax.random.uniform(k1, (input_size, hidden_size), jnp.float32, -bound1, bound1)
    b1 = jax.random.uniform(k2, (1, hidden_size), jnp.float32, -bound1, bound1)
    w2 = jax.random.uniform(k3, (hidden_size, output_size), jnp.float32, -bound2, bound2)
    b2 = jax.random.uniform(k4, (1, output_size), jnp.float32, -bound2, bound2)
    return w1, b1, w2, b2


def _reference(x, w1, b1, w2, b2):
    h = jax.nn.sigmoid(jnp.dot(x, w1, precision=_HIGHEST) + b1)
    logits = jnp.dot(h, w2, precision=_HIGHEST) + b2
    return jax.nn.softmax(logits, axis=1)


if __name__ == "__main__":
    key = jax.random.PRNGKey(0)
    k_params, k_x1, k_x2 = jax.random.split(key, 3)

    input_size, hidden_size, output_size = 4, 16, 3
    w1, b1, w2, b2 = init_params(k_params, input_size, hidden_size, output_size)

    # Case 1: batch exercising the multi-tile pipelined grid (2 tiles of 128).
    x_big = jax.random.normal(k_x1, (256, input_size), jnp.float32)
    out_big = jax.block_until_ready(mlp_forward(x_big, w1, b1, w2, b2, tb=128))

    # Case 2: small batch (tile clamps to 8 rows, single exact block).
    x_small = jax.random.normal(k_x2, (8, input_size), jnp.float32)
    out_small = jax.block_until_ready(mlp_forward(x_small, w1, b1, w2, b2))

    # Sanity checks vs. plain-JAX reference (same matmul precision on both sides).
    for x, out in ((x_big, out_big), (x_small, out_small)):
        ref = _reference(x, w1, b1, w2, b2)
        assert out.shape == (x.shape[0], output_size)
        assert jnp.allclose(out, ref, atol=5e-4, rtol=5e-4)
        assert jnp.allclose(jnp.sum(out, axis=1), 1.0, atol=1e-3)

    print("KERNEL_OK")
</pallas_src>

<mosaic_0001>
module attributes {stable_mosaic.version = 11 : i64} {
  func.func @mlp_kernel(%arg0: i32, %arg1: memref<128x4xf32, #tpu.memory_space<vmem>>, %arg2: memref<4x16xf32, #tpu.memory_space<vmem>>, %arg3: memref<1x16xf32, #tpu.memory_space<vmem>>, %arg4: memref<16x3xf32, #tpu.memory_space<vmem>>, %arg5: memref<1x3xf32, #tpu.memory_space<vmem>>, %arg6: memref<128x3xf32, #tpu.memory_space<vmem>>) attributes {dimension_semantics = [#tpu.dimension_semantics<parallel>], iteration_bounds = array<i64: 2>, scalar_prefetch = 0 : i64, scratch_operands = 0 : i64, tpu.core_type = #tpu.core_type<tc>, window_params = [{transform_indices = @transform_0, window_bounds = array<i64: 128, 4>}, {pipeline_mode = #tpu.pipeline_mode<synchronous>, transform_indices = @transform_1, window_bounds = array<i64: 4, 16>}, {pipeline_mode = #tpu.pipeline_mode<synchronous>, transform_indices = @transform_2, window_bounds = array<i64: 1, 16>}, {pipeline_mode = #tpu.pipeline_mode<synchronous>, transform_indices = @transform_3, window_bounds = array<i64: 16, 3>}, {pipeline_mode = #tpu.pipeline_mode<synchronous>, transform_indices = @transform_4, window_bounds = array<i64: 1, 3>}, {transform_indices = @transform_5, window_bounds = array<i64: 128, 3>}]} {
    %c0 = arith.constant 0 : index
    %c0_0 = arith.constant 0 : index
    %0 = vector.load %arg1[%c0, %c0_0] : memref<128x4xf32, #tpu.memory_space<vmem>>, vector<128x4xf32>
    %c0_1 = arith.constant 0 : index
    %c0_2 = arith.constant 0 : index
    %1 = vector.load %arg2[%c0_1, %c0_2] : memref<4x16xf32, #tpu.memory_space<vmem>>, vector<4x16xf32>
    %cst = arith.constant dense<0.000000e+00> : vector<128x16xf32>
    %2 = tpu.matmul %0, %1, %cst {dimension_numbers = #tpu.dot_dimension_numbers<[1], [0], [0], [1], [0, 0, 1, 1], [], []>, precision = #tpu.contract_precision<fp32>} : vector<128x4xf32>, vector<4x16xf32>, vector<128x16xf32> -> vector<128x16xf32>
    %c0_3 = arith.constant 0 : index
    %c0_4 = arith.constant 0 : index
    %3 = vector.load %arg3[%c0_3, %c0_4] : memref<1x16xf32, #tpu.memory_space<vmem>>, vector<1x16xf32>
    %4 = vector.broadcast %3 : vector<1x16xf32> to vector<128x16xf32>
    %5 = arith.addf %2, %4 : vector<128x16xf32>
    %6 = arith.negf %5 : vector<128x16xf32>
    %7 = math.exp %6 : vector<128x16xf32>
    %cst_5 = arith.constant 1.000000e+00 : f32
    %8 = vector.broadcast %cst_5 : f32 to vector<128x16xf32>
    %9 = arith.addf %8, %7 : vector<128x16xf32>
    %10 = arith.divf %8, %9 : vector<128x16xf32>
    %c0_6 = arith.constant 0 : index
    %c0_7 = arith.constant 0 : index
    %11 = vector.load %arg4[%c0_6, %c0_7] : memref<16x3xf32, #tpu.memory_space<vmem>>, vector<16x3xf32>
    %cst_8 = arith.constant dense<0.000000e+00> : vector<128x3xf32>
    %12 = tpu.matmul %10, %11, %cst_8 {dimension_numbers = #tpu.dot_dimension_numbers<[1], [0], [0], [1], [0, 0, 1, 1], [], []>, precision = #tpu.contract_precision<fp32>} : vector<128x16xf32>, vector<16x3xf32>, vector<128x3xf32> -> vector<128x3xf32>
    %c0_9 = arith.constant 0 : index
    %c0_10 = arith.constant 0 : index
    %13 = vector.load %arg5[%c0_9, %c0_10] : memref<1x3xf32, #tpu.memory_space<vmem>>, vector<1x3xf32>
    %14 = vector.broadcast %13 : vector<1x3xf32> to vector<128x3xf32>
    %15 = arith.addf %12, %14 : vector<128x3xf32>
    %cst_11 = arith.constant dense<0xFF800000> : vector<128xf32>
    %16 = vector.multi_reduction <maximumf>, %15, %cst_11 [1] : vector<128x3xf32> to vector<128xf32>
    %17 = vector.shape_cast %16 : vector<128xf32> to vector<128x1xf32>
    %18 = vector.broadcast %17 : vector<128x1xf32> to vector<128x3xf32>
    %19 = arith.subf %15, %18 : vector<128x3xf32>
    %20 = math.exp %19 : vector<128x3xf32>
    %cst_12 = arith.constant dense<0.000000e+00> : vector<128xf32>
    %21 = vector.multi_reduction <add>, %20, %cst_12 [1] : vector<128x3xf32> to vector<128xf32>
    %22 = vector.shape_cast %21 : vector<128xf32> to vector<128x1xf32>
    %23 = vector.broadcast %22 : vector<128x1xf32> to vector<128x3xf32>
    %24 = arith.divf %20, %23 : vector<128x3xf32>
    %c0_13 = arith.constant 0 : index
    %c0_14 = arith.constant 0 : index
    %25 = vector.load %arg6[%c0_13, %c0_14] : memref<128x3xf32, #tpu.memory_space<vmem>>, vector<128x3xf32>
    tpu.vector_store %arg6[%c0_13, %c0_14], %24 {strides = array<i32>} : memref<128x3xf32, #tpu.memory_space<vmem>>, vector<128x3xf32>,
    return
  }
  func.func @transform_0(%arg0: i32) -> (i32, i32) {
    %c0_i32 = arith.constant 0 : i32
    %c0_i32_0 = arith.constant 0 : i32
    return %arg0, %c0_i32 : i32, i32
  }
  func.func @transform_1(%arg0: i32) -> (i32, i32) {
    %c0_i32 = arith.constant 0 : i32
    %c0_i32_0 = arith.constant 0 : i32
    %c0_i32_1 = arith.constant 0 : i32
    return %c0_i32, %c0_i32_0 : i32, i32
  }
  func.func @transform_2(%arg0: i32) -> (i32, i32) {
    %c0_i32 = arith.constant 0 : i32
    %c0_i32_0 = arith.constant 0 : i32
    %c0_i32_1 = arith.constant 0 : i32
    return %c0_i32, %c0_i32_0 : i32, i32
  }
  func.func @transform_3(%arg0: i32) -> (i32, i32) {
    %c0_i32 = arith.constant 0 : i32
    %c0_i32_0 = arith.constant 0 : i32
    %c0_i32_1 = arith.constant 0 : i32
    return %c0_i32, %c0_i32_0 : i32, i32
  }
  func.func @transform_4(%arg0: i32) -> (i32, i32) {
    %c0_i32 = arith.constant 0 : i32
    %c0_i32_0 = arith.constant 0 : i32
    %c0_i32_1 = arith.constant 0 : i32
    return %c0_i32, %c0_i32_0 : i32, i32
  }
  func.func @transform_5(%arg0: i32) -> (i32, i32) {
    %c0_i32 = arith.constant 0 : i32
    %c0_i32_0 = arith.constant 0 : i32
    return %arg0, %c0_i32 : i32, i32
  }
}

</mosaic_0001>

<llo_original>
// kernel: tpu_custom_call.1
$region0: #{tpu_custom_call.1}
  #allocation0 [shape = 'u32[]', space=smem, size = 0x4, offset = 0x4, fixed_abs, tag = 'smem constant byte address 0x4 - core index']
  #allocation1 [shape = 'u32[144,128]{1,0:T(1,128)}', space=vmem, size = 0x12000, scoped, tag = 'internal scratch']
  %s0 = inlined_call_operand.vmem [shape: f32[256,4], index: 0, kind: input, shape index: {}]
  %s1 = inlined_call_operand.vmem [shape: f32[4,16], index: 1, kind: input, shape index: {}]
  %s2 = inlined_call_operand.vmem [shape: f32[1,16], index: 2, kind: input, shape index: {}]
  %s3 = inlined_call_operand.vmem [shape: f32[16,3], index: 3, kind: input, shape index: {}]
  %s4 = inlined_call_operand.vmem [shape: f32[1,3], index: 4, kind: input, shape index: {}]
  %s5 = inlined_call_operand.vmem [shape: f32[256,3], index: 5, kind: output, shape index: {}]
  %s6 = sld [smem:[#allocation0]]
  $region53: #{tpu_custom_call.1} parent=0
    _
  %s8 = ssub.s32 1, %s6
  %s9 = scalar_select 0, %s8, %s6
  loop: start=0, step=1, limit=4
  $region2: #{tpu_custom_call.1} parent=0 // loop_pre_header
    _
  $region3: #{tpu_custom_call.1} parent=0 // loop_header
    %s11 = sphi 0, %s15
    %p12 = scmp.ge.s32.totalorder %s11, 4
    %s21 = sphi 0, %s23
    %s24 = sphi 0, %s21
    %s25 = sphi 0, %s24
    %s41 = sphi 0, %s25
    %s45 = sphi 0, %s45
    %s47 = sphi 0, %s45
    %s48 = sphi 0, %s47
    %s62 = sphi 0, %s48
    %s66 = sphi 0, %s66
    %s68 = sphi 0, %s66
    %s69 = sphi 0, %s68
    %s83 = sphi 0, %s69
    %s87 = sphi 0, %s87
    %s89 = sphi 0, %s87
    %s90 = sphi 0, %s89
    %s104 = sphi 0, %s90
    %s108 = sphi 0, %s108
    %s110 = sphi 0, %s108
    %s111 = sphi 0, %s110
    %s125 = sphi 0, %s111
    %s131 = sphi 0, %s133
    %s134 = sphi 0, %s131
    %s135 = sphi 0, %s134
    %s151 = sphi 0, %s135
  $region4: #{tpu_custom_call.1} parent=0 // loop_header_branch
    %14 = sbr.rel (%p12) target = $region8
  $region5: #{tpu_custom_call.1} parent=0 // loop_body
    %s16 = ssub.s32 %s11, 1
    %s17 = ssub.s32 %s11, 2
    %s18 = sadd.s32 %s11, 1
    %s19 = ssub.s32 %s11, %s18
    %p20 = scmp.eq.s32.totalorder %s19, 0
    %s22 = sadd.s32 %s21, 1
    %s23 = scalar_select %p20, %s21, %s22
    %p26 = pneg %p20
    %p27 = scmp.eq.s32.totalorder %s11, 1
    %p28 = por %p26, %p27
    %p29 = scmp.ne.s32.totalorder %s21, %s24
    %p30 = scmp.eq.s32.totalorder %s11, 0
    %p31 = por %p29, %p30
    %p32 = scmp.ne.s32.totalorder %s21, %s24
    %p33 = scmp.eq.s32.totalorder %s16, 1
    %p34 = por %p32, %p33
    %p35 = scmp.ne.s32.totalorder %s24, %s25
    %p36 = scmp.eq.s32.totalorder %s16, 0
    %p37 = por %p35, %p36
    %p38 = scmp.ne.s32.totalorder %s24, %s25
    %p39 = scmp.eq.s32.totalorder %s17, 1
    %p40 = por %p38, %p39
    %p42 = scmp.ne.s32.totalorder %s25, %s41
    %p43 = scmp.eq.s32.totalorder %s17, 0
    %p44 = por %p42, %p43
    %s46 = sadd.s32 %s45, 1
    %p49 = scmp.eq.s32.totalorder %s11, 1
    %p50 = scmp.ne.s32.totalorder %s45, %s47
    %p51 = scmp.eq.s32.totalorder %s11, 0
    %p52 = por %p50, %p51
    %p53 = scmp.ne.s32.totalorder %s45, %s47
    %p54 = scmp.eq.s32.totalorder %s16, 1
    %p55 = por %p53, %p54
    %p56 = scmp.ne.s32.totalorder %s47, %s48
    %p57 = scmp.eq.s32.totalorder %s16, 0
    %p58 = por %p56, %p57
    %p59 = scmp.ne.s32.totalorder %s47, %s48
    %p60 = scmp.eq.s32.totalorder %s17, 1
    %p61 = por %p59, %p60
    %p63 = scmp.ne.s32.totalorder %s48, %s62
    %p64 = scmp.eq.s32.totalorder %s17, 0
    %p65 = por %p63, %p64
    %s67 = sadd.s32 %s66, 1
    %p70 = scmp.eq.s32.totalorder %s11, 1
    %p71 = scmp.ne.s32.totalorder %s66, %s68
    %p72 = scmp.eq.s32.totalorder %s11, 0
    %p73 = por %p71, %p72
    %p74 = scmp.ne.s32.totalorder %s66, %s68
    %p75 = scmp.eq.s32.totalorder %s16, 1
    %p76 = por %p74, %p75
    %p77 = scmp.ne.s32.totalorder %s68, %s69
    %p78 = scmp.eq.s32.totalorder %s16, 0
    %p79 = por %p77, %p78
    %p80 = scmp.ne.s32.totalorder %s68, %s69
    %p81 = scmp.eq.s32.totalorder %s17, 1
    %p82 = por %p80, %p81
    %p84 = scmp.ne.s32.totalorder %s69, %s83
    %p85 = scmp.eq.s32.totalorder %s17, 0
    %p86 = por %p84, %p85
    %s88 = sadd.s32 %s87, 1
    %p91 = scmp.eq.s32.totalorder %s11, 1
    %p92 = scmp.ne.s32.totalorder %s87, %s89
    %p93 = scmp.eq.s32.totalorder %s11, 0
    %p94 = por %p92, %p93
    %p95 = scmp.ne.s32.totalorder %s87, %s89
    %p96 = scmp.eq.s32.totalorder %s16, 1
    %p97 = por %p95, %p96
    %p98 = scmp.ne.s32.totalorder %s89, %s90
    %p99 = scmp.eq.s32.totalorder %s16, 0
    %p100 = por %p98, %p99
    %p101 = scmp.ne.s32.totalorder %s89, %s90
    %p102 = scmp.eq.s32.totalorder %s17, 1
    %p103 = por %p101, %p102
    %p105 = scmp.ne.s32.totalorder %s90, %s104
    %p106 = scmp.eq.s32.totalorder %s17, 0
    %p107 = por %p105, %p106
    %s109 = sadd.s32 %s108, 1
    %p112 = scmp.eq.s32.totalorder %s11, 1
    %p113 = scmp.ne.s32.totalorder %s108, %s110
    %p114 = scmp.eq.s32.totalorder %s11, 0
    %p115 = por %p113, %p114
    %p116 = scmp.ne.s32.totalorder %s108, %s110
    %p117 = scmp.eq.s32.totalorder %s16, 1
    %p118 = por %p116, %p117
    %p119 = scmp.ne.s32.totalorder %s110, %s111
    %p120 = scmp.eq.s32.totalorder %s16, 0
    %p121 = por %p119, %p120
    %p122 = scmp.ne.s32.totalorder %s110, %s111
    %p123 = scmp.eq.s32.totalorder %s17, 1
    %p124 = por %p122, %p123
    %p126 = scmp.ne.s32.totalorder %s111, %s125
    %p127 = scmp.eq.s32.totalorder %s17, 0
    %p128 = por %p126, %p127
    %s129 = ssub.s32 %s11, %s18
    %p130 = scmp.eq.s32.totalorder %s129, 0
    %s132 = sadd.s32 %s131, 1
    %s133 = scalar_select %p130, %s131, %s132
    %p136 = pneg %p130
    %p137 = scmp.eq.s32.totalorder %s11, 1
    %p138 = por %p136, %p137
    %p139 = scmp.ne.s32.totalorder %s131, %s134
    %p140 = scmp.eq.s32.totalorder %s11, 0
    %p141 = por %p139, %p140
    %p142 = scmp.ne.s32.totalorder %s131, %s134
    %p143 = scmp.eq.s32.totalorder %s16, 1
    %p144 = por %p142, %p143
    %p145 = scmp.ne.s32.totalorder %s134, %s135
    %p146 = scmp.eq.s32.totalorder %s16, 0
    %p147 = por %p145, %p146
    %p148 = scmp.ne.s32.totalorder %s134, %s135
    %p149 = scmp.eq.s32.totalorder %s17, 1
    %p150 = por %p148, %p149
    %p152 = scmp.ne.s32.totalorder %s135, %s151
    %p153 = scmp.eq.s32.totalorder %s17, 0
    %p154 = por %p152, %p153
    %p155 = scmp.le.s32.totalorder 1, %s11
    %p156 = scmp.lt.s32.totalorder %s11, 3
    %p157 = pnand %p155, %p156
    %p158 = pneg %p157
    // Predicated region
    $region9: #{tpu_custom_call.1} parent=5 // pred_check
      _
    $region10: #{tpu_custom_call.1} parent=5 // pred_check_branch
      %160 = sbr.rel (%p157) target = $region12
    $region11: #{tpu_custom_call.1} parent=5 // pred_region
      %s161 = ssub.s32 %s11, 1
      // Predicated region
      $region13: #{tpu_custom_call.1} parent=11 // pred_check
        %p162 = pneg %p58
      $region14: #{tpu_custom_call.1} parent=11 // pred_check_branch
        %164 = sbr.rel (%p162) target = $region16
      $region15: #{tpu_custom_call.1} parent=11 // pred_region
        _
      $region16: #{tpu_custom_call.1} parent=11 // pred_fallthru
        _
      // Predicated region
      $region17: #{tpu_custom_call.1} parent=11 // pred_check
        %p165 = pneg %p79
      $region18: #{tpu_custom_call.1} parent=11 // pred_check_branch
        %167 = sbr.rel (%p165) target = $region20
      $region19: #{tpu_custom_call.1} parent=11 // pred_region
        _
      $region20: #{tpu_custom_call.1} parent=11 // pred_fallthru
        _
      // Predicated region
      $region21: #{tpu_custom_call.1} parent=11 // pred_check
        %p168 = pneg %p100
      $region22: #{tpu_custom_call.1} parent=11 // pred_check_branch
        %170 = sbr.rel (%p168) target = $region24
      $region23: #{tpu_custom_call.1} parent=11 // pred_region
        _
      $region24: #{tpu_custom_call.1} parent=11 // pred_fallthru
        _
      // Predicated region
      $region25: #{tpu_custom_call.1} parent=11 // pred_check
        %p171 = pneg %p121
      $region26: #{tpu_custom_call.1} parent=11 // pred_check_branch
        %173 = sbr.rel (%p171) target = $region28
      $region27: #{tpu_custom_call.1} parent=11 // pred_region
        _
      $region28: #{tpu_custom_call.1} parent=11 // pred_fallthru
        _
    $region12: #{tpu_custom_call.1} parent=5 // pred_fallthru
      _
    %p174 = scmp.lt.s32.totalorder %s11, 2
    // Predicated region
    $region29: #{tpu_custom_call.1} parent=5 // pred_check
      %p175 = pneg %p174
    $region30: #{tpu_custom_call.1} parent=5 // pred_check_branch
      %177 = sbr.rel (%p175) target = $region32
    $region31: #{tpu_custom_call.1} parent=5 // pred_region
      // Predicated region
      $region33: #{tpu_custom_call.1} parent=31 // pred_check
        %p178 = pneg %p31
      $region34: #{tpu_custom_call.1} parent=31 // pred_check_branch
        %180 = sbr.rel (%p178) target = $region36
      $region35: #{tpu_custom_call.1} parent=31 // pred_region
        %s181 = smul.u32 16, %s11
        %p182 = scmp.lt.s32.totalorder %s181, 31
        %s183 = scalar_select %p182, %s181, 31
        %s184 = smul.addr %s183, 8
        %s185 = scalar_lea.vmem %s0, %s184
        %s186 = smul.u32 16, %s11
      $region36: #{tpu_custom_call.1} parent=31 // pred_fallthru
        _
    $region32: #{tpu_custom_call.1} parent=5 // pred_fallthru
      _
    %p187 = scmp.le.s32.totalorder 1, %s11
    %p188 = scmp.lt.s32.totalorder %s11, 3
    %p189 = pnand %p187, %p188
    %p190 = pneg %p189
    // Predicated region
    $region37: #{tpu_custom_call.1} parent=5 // pred_check
      _
    $region38: #{tpu_custom_call.1} parent=5 // pred_check_branch
      %192 = sbr.rel (%p189) target = $region40
    $region39: #{tpu_custom_call.1} parent=5 // pred_region
      %s193 = ssub.s32 %s11, 1
      %s194 = smul.u32 16, %s16
      %p195 = scmp.lt.s32.totalorder %s194, 31
      %s196 = scalar_select %p195, %s194, 31
      %s197 = smul.addr %s196, 8
      %s198 = scalar_lea.vmem %s0, %s197
      %p199 = pneg %p37
      %p200 = pneg %p34
      %p201 = pneg %p58
      %p202 = pneg %p55
      %p203 = pneg %p79
      %p204 = pneg %p76
      %p205 = pneg %p100
      %p206 = pneg %p97
      %p207 = pneg %p121
      %p208 = pneg %p118
      %p209 = pneg %p147
      %p210 = pneg %p144
      %s211 = smul.u32 16, %s16
      %p212 = scmp.lt.s32.totalorder %s211, 31
      %s213 = scalar_select %p212, %s211, 31
      %s214 = smul.addr %s213, 8
      %s215 = scalar_lea.vmem %s5, %s214
      %s216 = smul.u32 16, %s16
      %p217 = scmp.lt.s32.totalorder %s216, 31
      %s218 = scalar_select %p217, %s216, 31
      %s219 = smul.addr %s218, 8
      %s220 = scalar_lea.vmem %s0, %s219
      %s221 = smul.u32 16, %s16
      %s222 = smul.u32 16, %s16
      %p223 = scmp.lt.s32.totalorder %s222, 31
      %s224 = scalar_select %p223, %s222, 31
      %s225 = smul.addr %s224, 8
      %s226 = scalar_lea.vmem %s5, %s225
      %s227 = smul.u32 16, %s16
      %v228 = vld [vmem:[%s220] sm:$0xff]
      %v229 = vld [vmem:[%s220 + $0x8] sm:$0xff]
      %v230 = vld [vmem:[%s220 + $0x10] sm:$0xff]
      %v231 = vld [vmem:[%s220 + $0x18] sm:$0xff]
      %v232 = vld [vmem:[%s220 + $0x20] sm:$0xff]
      %v233 = vld [vmem:[%s220 + $0x28] sm:$0xff]
      %v234 = vld [vmem:[%s220 + $0x30] sm:$0xff]
      %v235 = vld [vmem:[%s220 + $0x38] sm:$0xff]
      %v236 = vld [vmem:[%s220 + $0x40] sm:$0xff]
      %v237 = vld [vmem:[%s220 + $0x48] sm:$0xff]
      %v238 = vld [vmem:[%s220 + $0x50] sm:$0xff]
      %v239 = vld [vmem:[%s220 + $0x58] sm:$0xff]
      %v240 = vld [vmem:[%s220 + $0x60] sm:$0xff]
      %v241 = vld [vmem:[%s220 + $0x68] sm:$0xff]
      %v242 = vld [vmem:[%s220 + $0x70] sm:$0xff]
      %v243 = vld [vmem:[%s220 + $0x78] sm:$0xff]
      %v244 = vld [vmem:[%s1] sm:$0xf]
      %v245 = vld [vmem:[%s2] sm:$0x1]
      %v247 = vlaneseq
      %v248 = vshrl.u32 %v247, 7
      %v249 = vsub.s32 0, %v248
      %v250 = vrot.slane %v245, %v249
      %vm252 = vcmask 31744
      %v254 = vsel %vm252, %v228, 0
      %v257 = vsel %vm252, %v229, 0
      %v260 = vsel %vm252, %v230, 0
      %v263 = vsel %vm252, %v231, 0
      %v266 = vsel %vm252, %v232, 0
      %v269 = vsel %vm252, %v233, 0
      %v272 = vsel %vm252, %v234, 0
      %v275 = vsel %vm252, %v235, 0
      %v278 = vsel %vm252, %v236, 0
      %v281 = vsel %vm252, %v237, 0
      %v284 = vsel %vm252, %v238, 0
      %v287 = vsel %vm252, %v239, 0
      %v290 = vsel %vm252, %v240, 0
      %v293 = vsel %vm252, %v241, 0
      %v296 = vsel %vm252, %v242, 0
      %v299 = vsel %vm252, %v243, 0
      %vm301 = vcmask 1043456
      %v303 = vsel %vm301, %v244, 0
      %305 = vmatprep.subr.mxu0 0.0
      %v306 = vand.u32 %v303, 4294901760
      %307 = vmatpush1.msra.mxu0 %v306
      %308 = vmatprep.subr.mxu0 0.0
      %309 = vmatpush1.msra.mxu0 0.0
      %310 = vmatprep.subr.mxu0 0.0
      %311 = vmatpush1.msra.mxu0 0.0
      %312 = vmatprep.subr.mxu0 0.0
      %313 = vmatpush1.msra.mxu0 0.0
      %314 = vmatprep.subr.mxu0 0.0
      %315 = vmatpush1.msra.mxu0 0.0
      %316 = vmatprep.subr.mxu0 0.0
      %317 = vmatpush1.msra.mxu0 0.0
      %318 = vmatprep.subr.mxu0 0.0
      %319 = vmatpush1.msra.mxu0 0.0
      %320 = vmatprep.subr.mxu0 0.0
      %321 = vmatpush1.msra.mxu0 0.0
      %322 = vmatprep.subr.mxu0 0.0
      %323 = vmatpush1.msra.mxu0 0.0
      %324 = vmatprep.subr.mxu0 0.0
      %325 = vmatpush1.msra.mxu0 0.0
      %326 = vmatprep.subr.mxu0 0.0
      %327 = vmatpush1.msra.mxu0 0.0
      %328 = vmatprep.subr.mxu0 0.0
      %329 = vmatpush1.msra.mxu0 0.0
      %330 = vmatprep.subr.mxu0 0.0
      %331 = vmatpush1.msra.mxu0 0.0
      %332 = vmatprep.subr.mxu0 0.0
      %333 = vmatpush1.msra.mxu0 0.0
      %334 = vmatprep.subr.mxu0 0.0
      %335 = vmatpush1.msra.mxu0 0.0
      %336 = vmatprep.subr.mxu0 0.0
      %337 = vmatpush1.msra.mxu0 0.0
      %338 = vmatprep.subr.mxu0 0.0
      %339 = vmatpush1.msra.mxu0 0.0
      %340 = vmatprep.subr.mxu0 0.0
      %341 = vmatpush1.msra.mxu0 0.0
      %342 = vmatprep.subr.mxu0 0.0
      %343 = vmatpush1.msra.mxu0 0.0
      %344 = vmatprep.subr.mxu0 0.0
      %345 = vmatpush1.msra.mxu0 0.0
      %346 = vmatprep.subr.mxu0 0.0
      %347 = vmatpush1.msra.mxu0 0.0
      %348 = vmatprep.subr.mxu0 0.0
      %349 = vmatpush1.msra.mxu0 0.0
      %350 = vmatprep.subr.mxu0 0.0
      %351 = vmatpush1.msra.mxu0 0.0
      %352 = vmatprep.subr.mxu0 0.0
      %353 = vmatpush1.msra.mxu0 0.0
      %354 = vmatprep.subr.mxu0 0.0
      %355 = vmatpush1.msra.mxu0 0.0
      %356 = vmatprep.subr.mxu0 0.0
      %357 = vmatpush1.msra.mxu0 0.0
      %358 = vmatprep.subr.mxu0 0.0
      %359 = vmatpush1.msra.mxu0 0.0
      %360 = vmatprep.subr.mxu0 0.0
      %361 = vmatpush1.msra.mxu0 0.0
      %362 = vmatprep.subr.mxu0 0.0
      %363 = vmatpush1.msra.mxu0 0.0
      %364 = vmatprep.subr.mxu0 0.0
      %365 = vmatpush1.msra.mxu0 0.0
      %366 = vmatprep.subr.mxu0 0.0
      %367 = vmatpush1.msra.mxu0 0.0
      %368 = vmatprep.subr.mxu0 0.0
      %369 = vmatpush1.msra.mxu0 0.0
      %370 = vmatprep.mubr.f32.mxu0 0.0
      %v371 = vand.u32 %v254, 4294901760
      %v372 = vsub.f32 %v254, %v371
      %v373 = vand.u32 %v372, 4294901760
      %v374 = vsub.f32 %v372, %v373
      %v375 = vand.u32 %v374, 4294901760
      %376 = vmatmul.mubr.f32.gmra.mrb[0].mxu0 %v375
      %v377 = vpop.f32.mrb[0].mxu0
      %v378 = vadd.f32 %v250, %v377
      %v379 = vpop.f32.mrb[0].mxu0
      %380 = vmatprep.mubr.f32.mxu0 0.0
      %v381 = vand.u32 %v257, 4294901760
      %v382 = vsub.f32 %v257, %v381
      %v383 = vand.u32 %v382, 4294901760
      %v384 = vsub.f32 %v382, %v383
      %v385 = vand.u32 %v384, 4294901760
      %386 = vmatmul.mubr.f32.gmra.mrb[0].mxu0 %v385
      %v387 = vpop.f32.mrb[0].mxu0
      %v388 = vadd.f32 %v250, %v387
      %v389 = vpop.f32.mrb[0].mxu0
      %390 = vmatprep.mubr.f32.mxu0 0.0
      %v391 = vand.u32 %v260, 4294901760
      %v392 = vsub.f32 %v260, %v391
      %v393 = vand.u32 %v392, 4294901760
      %v394 = vsub.f32 %v392, %v393
      %v395 = vand.u32 %v394, 4294901760
      %396 = vmatmul.mubr.f32.gmra.mrb[0].mxu0 %v395
      %v397 = vpop.f32.mrb[0].mxu0
      %v398 = vadd.f32 %v250, %v397
      %v399 = vpop.f32.mrb[0].mxu0
      %400 = vmatprep.mubr.f32.mxu0 0.0
      %v401 = vand.u32 %v263, 4294901760
      %v402 = vsub.f32 %v263, %v401
      %v403 = vand.u32 %v402, 4294901760
      %v404 = vsub.f32 %v402, %v403
      %v405 = vand.u32 %v404, 4294901760
      %406 = vmatmul.mubr.f32.gmra.mrb[0].mxu0 %v405
      %v407 = vpop.f32.mrb[0].mxu0
      %v408 = vadd.f32 %v250, %v407
      %v409 = vpop.f32.mrb[0].mxu0
      %410 = vmatprep.mubr.f32.mxu0 0.0
      %v411 = vand.u32 %v266, 4294901760
      %v412 = vsub.f32 %v266, %v411
      %v413 = vand.u32 %v412, 4294901760
      %v414 = vsub.f32 %v412, %v413
      %v415 = vand.u32 %v414, 4294901760
      %416 = vmatmul.mubr.f32.gmra.mrb[0].mxu0 %v415
      %v417 = vpop.f32.mrb[0].mxu0
      %v418 = vadd.f32 %v250, %v417
      %v419 = vpop.f32.mrb[0].mxu0
      %420 = vmatprep.mubr.f32.mxu0 0.0
      %v421 = vand.u32 %v269, 4294901760
      %v422 = vsub.f32 %v269, %v421
      %v423 = vand.u32 %v422, 4294901760
      %v424 = vsub.f32 %v422, %v423
      %v425 = vand.u32 %v424, 4294901760
      %426 = vmatmul.mubr.f32.gmra.mrb[0].mxu0 %v425
      %v427 = vpop.f32.mrb[0].mxu0
      %v428 = vadd.f32 %v250, %v427
      %v429 = vpop.f32.mrb[0].mxu0
      %430 = vmatprep.mubr.f32.mxu0 0.0
      %v431 = vand.u32 %v272, 4294901760
      %v432 = vsub.f32 %v272, %v431
      %v433 = vand.u32 %v432, 4294901760
      %v434 = vsub.f32 %v432, %v433
      %v435 = vand.u32 %v434, 4294901760
      %436 = vmatmul.mubr.f32.gmra.mrb[0].mxu0 %v435
      %v437 = vpop.f32.mrb[0].mxu0
      %v438 = vadd.f32 %v250, %v437
      %v439 = vpop.f32.mrb[0].mxu0
      %440 = vmatprep.mubr.f32.mxu0 0.0
      %v441 = vand.u32 %v275, 4294901760
      %v442 = vsub.f32 %v275, %v441
      %v443 = vand.u32 %v442, 4294901760
      %v444 = vsub.f32 %v442, %v443
      %v445 = vand.u32 %v444, 4294901760
      %446 = vmatmul.mubr.f32.gmra.mrb[0].mxu0 %v445
      %v447 = vpop.f32.mrb[0].mxu0
      %v448 = vadd.f32 %v250, %v447
      %v449 = vpop.f32.mrb[0].mxu0
      %450 = vmatprep.mubr.f32.mxu0 0.0
      %v451 = vand.u32 %v278, 4294901760
      %v452 = vsub.f32 %v278, %v451
      %v453 = vand.u32 %v452, 4294901760
      %v454 = vsub.f32 %v452, %v453
      %v455 = vand.u32 %v454, 4294901760
      %456 = vmatmul.mubr.f32.gmra.mrb[0].mxu0 %v455
      %v457 = vpop.f32.mrb[0].mxu0
      %v458 = vadd.f32 %v250, %v457
      %v459 = vpop.f32.mrb[0].mxu0
      %460 = vmatprep.mubr.f32.mxu0 0.0
      %v461 = vand.u32 %v281, 4294901760
      %v462 = vsub.f32 %v281, %v461
      %v463 = vand.u32 %v462, 4294901760
      %v464 = vsub.f32 %v462, %v463
      %v465 = vand.u32 %v464, 4294901760
      %466 = vmatmul.mubr.f32.gmra.mrb[0].mxu0 %v465
      %v467 = vpop.f32.mrb[0].mxu0
      %v468 = vadd.f32 %v250, %v467
      %v469 = vpop.f32.mrb[0].mxu0
      %470 = vmatprep.mubr.f32.mxu0 0.0
      %v471 = vand.u32 %v284, 4294901760
      %v472 = vsub.f32 %v284, %v471
      %v473 = vand.u32 %v472, 4294901760
      %v474 = vsub.f32 %v472, %v473
      %v475 = vand.u32 %v474, 4294901760
      %476 = vmatmul.mubr.f32.gmra.mrb[0].mxu0 %v475
      %v477 = vpop.f32.mrb[0].mxu0
      %v478 = vadd.f32 %v250, %v477
      %v479 = vpop.f32.mrb[0].mxu0
      %480 = vmatprep.mubr.f32.mxu0 0.0
      %v481 = vand.u32 %v287, 4294901760
      %v482 = vsub.f32 %v287, %v481
      %v483 = vand.u32 %v482, 4294901760
      %v484 = vsub.f32 %v482, %v483
      %v485 = vand.u32 %v484, 4294901760
      %486 = vmatmul.mubr.f32.gmra.mrb[0].mxu0 %v485
      %v487 = vpop.f32.mrb[0].mxu0
      %v488 = vadd.f32 %v250, %v487
      %v489 = vpop.f32.mrb[0].mxu0
      %490 = vmatprep.mubr.f32.mxu0 0.0
      %v491 = vand.u32 %v290, 4294901760
      %v492 = vsub.f32 %v290, %v491
      %v493 = vand.u32 %v492, 4294901760
      %v494 = vsub.f32 %v492, %v493
      %v495 = vand.u32 %v494, 4294901760
      %496 = vmatmul.mubr.f32.gmra.mrb[0].mxu0 %v495
      %v497 = vpop.f32.mrb[0].mxu0
      %v498 = vadd.f32 %v250, %v497
      %v499 = vpop.f32.mrb[0].mxu0
      %500 = vmatprep.mubr.f32.mxu0 0.0
      %v501 = vand.u32 %v293, 4294901760
      %v502 = vsub.f32 %v293, %v501
      %v503 = vand.u32 %v502, 4294901760
      %v504 = vsub.f32 %v502, %v503
      %v505 = vand.u32 %v504, 4294901760
      %506 = vmatmul.mubr.f32.gmra.mrb[0].mxu0 %v505
      %v507 = vpop.f32.mrb[0].mxu0
      %v508 = vadd.f32 %v250, %v507
      %v509 = vpop.f32.mrb[0].mxu0
      %510 = vmatprep.mubr.f32.mxu0 0.0
      %v511 = vand.u32 %v296, 4294901760
      %v512 = vsub.f32 %v296, %v511
      %v513 = vand.u32 %v512, 4294901760
      %v514 = vsub.f32 %v512, %v513
      %v515 = vand.u32 %v514, 4294901760
      %516 = vmatmul.mubr.f32.gmra.mrb[0].mxu0 %v515
      %v517 = vpop.f32.mrb[0].mxu0
      %v518 = vadd.f32 %v250, %v517
      %v519 = vpop.f32.mrb[0].mxu0
      %520 = vmatprep.mubr.f32.mxu0 0.0
      %v521 = vand.u32 %v299, 4294901760
      %v522 = vsub.f32 %v299, %v521
      %v523 = vand.u32 %v522, 4294901760
      %v524 = vsub.f32 %v522, %v523
      %v525 = vand.u32 %v524, 4294901760
      %526 = vmatmul.mubr.f32.gmra.mrb[0].mxu0 %v525
      %v527 = vpop.f32.mrb[0].mxu0
      %v528 = vadd.f32 %v250, %v527
      %v529 = vpop.f32.mrb[0].mxu0
      %530 = vdwg.mxu0
      %531 = vmatprep.subr.mxu0 0.0
      %v532 = vand.u32 %v303, 4294901760
      %v533 = vsub.f32 %v303, %v532
      %v534 = vand.u32 %v533, 4294901760
      %v535 = vsub.f32 %v533, %v534
      %v536 = vand.u32 %v535, 4294901760
      %537 = vmatpush1.msra.mxu0 %v536
      %538 = vmatprep.subr.mxu0 0.0
      %539 = vmatpush1.msra.mxu0 0.0
      %540 = vmatprep.subr.mxu0 0.0
      %541 = vmatpush1.msra.mxu0 0.0
      %542 = vmatprep.subr.mxu0 0.0
      %543 = vmatpush1.msra.mxu0 0.0
      %544 = vmatprep.subr.mxu0 0.0
      %545 = vmatpush1.msra.mxu0 0.0
      %546 = vmatprep.subr.mxu0 0.0
      %547 = vmatpush1.msra.mxu0 0.0
      %548 = vmatprep.subr.mxu0 0.0
      %549 = vmatpush1.msra.mxu0 0.0
      %550 = vmatprep.subr.mxu0 0.0
      %551 = vmatpush1.msra.mxu0 0.0
      %552 = vmatprep.subr.mxu0 0.0
      %553 = vmatpush1.msra.mxu0 0.0
      %554 = vmatprep.subr.mxu0 0.0
      %555 = vmatpush1.msra.mxu0 0.0
      %556 = vmatprep.subr.mxu0 0.0
      %557 = vmatpush1.msra.mxu0 0.0
      %558 = vmatprep.subr.mxu0 0.0
      %559 = vmatpush1.msra.mxu0 0.0
      %560 = vmatprep.subr.mxu0 0.0
      %561 = vmatpush1.msra.mxu0 0.0
      %562 = vmatprep.subr.mxu0 0.0
      %563 = vmatpush1.msra.mxu0 0.0
      %564 = vmatprep.subr.mxu0 0.0
      %565 = vmatpush1.msra.mxu0 0.0
      %566 = vmatprep.subr.mxu0 0.0
      %567 = vmatpush1.msra.mxu0 0.0
      %568 = vmatprep.subr.mxu0 0.0
      %569 = vmatpush1.msra.mxu0 0.0
      %570 = vmatprep.subr.mxu0 0.0
      %571 = vmatpush1.msra.mxu0 0.0
      %572 = vmatprep.subr.mxu0 0.0
      %573 = vmatpush1.msra.mxu0 0.0
      %574 = vmatprep.subr.mxu0 0.0
      %575 = vmatpush1.msra.mxu0 0.0
      %576 = vmatprep.subr.mxu0 0.0
      %577 = vmatpush1.msra.mxu0 0.0
      %578 = vmatprep.subr.mxu0 0.0
      %579 = vmatpush1.msra.mxu0 0.0
      %580 = vmatprep.subr.mxu0 0.0
      %581 = vmatpush1.msra.mxu0 0.0
      %582 = vmatprep.subr.mxu0 0.0
      %583 = vmatpush1.msra.mxu0 0.0
      %584 = vmatprep.subr.mxu0 0.0
      %585 = vmatpush1.msra.mxu0 0.0
      %586 = vmatprep.subr.mxu0 0.0
      %587 = vmatpush1.msra.mxu0 0.0
      %588 = vmatprep.subr.mxu0 0.0
      %589 = vmatpush1.msra.mxu0 0.0
      %590 = vmatprep.subr.mxu0 0.0
      %591 = vmatpush1.msra.mxu0 0.0
      %592 = vmatprep.subr.mxu0 0.0
      %593 = vmatpush1.msra.mxu0 0.0
      %594 = vmatprep.subr.mxu0 0.0
      %595 = vmatpush1.msra.mxu0 0.0
      %596 = vmatprep.subr.mxu0 0.0
      %597 = vmatpush1.msra.mxu0 0.0
      %598 = vmatprep.subr.mxu0 0.0
      %599 = vmatpush1.msra.mxu0 0.0
      %600 = vmatprep.mubr.f32.mxu0 0.0
      %v601 = vand.u32 %v254, 4294901760
      %602 = vmatmul.mubr.f32.gmra.mrb[0].mxu0 %v601
      %v603 = vpop.f32.mrb[0].mxu0
      %v604 = vadd.f32 %v378, %v603
      %v605 = vpop.f32.mrb[0].mxu0
      %606 = vmatprep.mubr.f32.mxu0 0.0
      %v607 = vand.u32 %v257, 4294901760
      %608 = vmatmul.mubr.f32.gmra.mrb[0].mxu0 %v607
      %v609 = vpop.f32.mrb[0].mxu0
      %v610 = vadd.f32 %v388, %v609
      %v611 = vpop.f32.mrb[0].mxu0
      %612 = vmatprep.mubr.f32.mxu0 0.0
      %v613 = vand.u32 %v260, 4294901760
      %614 = vmatmul.mubr.f32.gmra.mrb[0].mxu0 %v613
      %v615 = vpop.f32.mrb[0].mxu0
      %v616 = vadd.f32 %v398, %v615
      %v617 = vpop.f32.mrb[0].mxu0
      %618 = vmatprep.mubr.f32.mxu0 0.0
      %v619 = vand.u32 %v263, 4294901760
      %620 = vmatmul.mubr.f32.gmra.mrb[0].mxu0 %v619
      %v621 = vpop.f32.mrb[0].mxu0
      %v622 = vadd.f32 %v408, %v621
      %v623 = vpop.f32.mrb[0].mxu0
      %624 = vmatprep.mubr.f32.mxu0 0.0
      %v625 = vand.u32 %v266, 4294901760
      %626 = vmatmul.mubr.f32.gmra.mrb[0].mxu0 %v625
      %v627 = vpop.f32.mrb[0].mxu0
      %v628 = vadd.f32 %v418, %v627
      %v629 = vpop.f32.mrb[0].mxu0
      %630 = vmatprep.mubr.f32.mxu0 0.0
      %v631 = vand.u32 %v269, 4294901760
      %632 = vmatmul.mubr.f32.gmra.mrb[0].mxu0 %v631
      %v633 = vpop.f32.mrb[0].mxu0
      %v634 = vadd.f32 %v428, %v633
      %v635 = vpop.f32.mrb[0].mxu0
      %636 = vmatprep.mubr.f32.mxu0 0.0
      %v637 = vand.u32 %v272, 4294901760
      %638 = vmatmul.mubr.f32.gmra.mrb[0].mxu0 %v637
      %v639 = vpop.f32.mrb[0].mxu0
      %v640 = vadd.f32 %v438, %v639
      %v641 = vpop.f32.mrb[0].mxu0
      %642 = vmatprep.mubr.f32.mxu0 0.0
      %v643 = vand.u32 %v275, 4294901760
      %644 = vmatmul.mubr.f32.gmra.mrb[0].mxu0 %v643
      %v645 = vpop.f32.mrb[0].mxu0
      %v646 = vadd.f32 %v448, %v645
      %v647 = vpop.f32.mrb[0].mxu0
      %648 = vmatprep.mubr.f32.mxu0 0.0
      %v649 = vand.u32 %v278, 4294901760
      %650 = vmatmul.mubr.f32.gmra.mrb[0].mxu0 %v649
      %v651 = vpop.f32.mrb[0].mxu0
      %v652 = vadd.f32 %v458, %v651
      %v653 = vpop.f32.mrb[0].mxu0
      %654 = vmatprep.mubr.f32.mxu0 0.0
      %v655 = vand.u32 %v281, 4294901760
      %656 = vmatmul.mubr.f32.gmra.mrb[0].mxu0 %v655
      %v657 = vpop.f32.mrb[0].mxu0
      %v658 = vadd.f32 %v468, %v657
      %v659 = vpop.f32.mrb[0].mxu0
      %660 = vmatprep.mubr.f32.mxu0 0.0
      %v661 = vand.u32 %v284, 4294901760
      %662 = vmatmul.mubr.f32.gmra.mrb[0].mxu0 %v661
      %v663 = vpop.f32.mrb[0].mxu0
      %v664 = vadd.f32 %v478, %v663
      %v665 = vpop.f32.mrb[0].mxu0
      %666 = vmatprep.mubr.f32.mxu0 0.0
      %v667 = vand.u32 %v287, 4294901760
      %668 = vmatmul.mubr.f32.gmra.mrb[0].mxu0 %v667
      %v669 = vpop.f32.mrb[0].mxu0
      %v670 = vadd.f32 %v488, %v669
      %v671 = vpop.f32.mrb[0].mxu0
      %672 = vmatprep.mubr.f32.mxu0 0.0
      %v673 = vand.u32 %v290, 4294901760
      %674 = vmatmul.mubr.f32.gmra.mrb[0].mxu0 %v673
      %v675 = vpop.f32.mrb[0].mxu0
      %v676 = vadd.f32 %v498, %v675
      %v677 = vpop.f32.mrb[0].mxu0
      %678 = vmatprep.mubr.f32.mxu0 0.0
      %v679 = vand.u32 %v293, 4294901760
      %680 = vmatmul.mubr.f32.gmra.mrb[0].mxu0 %v679
      %v681 = vpop.f32.mrb[0].mxu0
      %v682 = vadd.f32 %v508, %v681
      %v683 = vpop.f32.mrb[0].mxu0
      %684 = vmatprep.mubr.f32.mxu0 0.0
      %v685 = vand.u32 %v296, 4294901760
      %686 = vmatmul.mubr.f32.gmra.mrb[0].mxu0 %v685
      %v687 = vpop.f32.mrb[0].mxu0
      %v688 = vadd.f32 %v518, %v687
      %v689 = vpop.f32.mrb[0].mxu0
      %690 = vmatprep.mubr.f32.mxu0 0.0
      %v691 = vand.u32 %v299, 4294901760
      %692 = vmatmul.mubr.f32.gmra.mrb[0].mxu0 %v691
      %v693 = vpop.f32.mrb[0].mxu0
      %v694 = vadd.f32 %v528, %v693
      %v695 = vpop.f32.mrb[0].mxu0
      %696 = vdwg.mxu0
      %697 = vmatprep.subr.mxu0 0.0
      %v698 = vand.u32 %v303, 4294901760
      %v699 = vsub.f32 %v303, %v698
      %700 = vmatpush1.msra.mxu0 %v699
      %701 = vmatprep.subr.mxu0 0.0
      %702 = vmatpush1.msra.mxu0 0.0
      %703 = vmatprep.subr.mxu0 0.0
      %704 = vmatpush1.msra.mxu0 0.0
      %705 = vmatprep.subr.mxu0 0.0
      %706 = vmatpush1.msra.mxu0 0.0
      %707 = vmatprep.subr.mxu0 0.0
      %708 = vmatpush1.msra.mxu0 0.0
      %709 = vmatprep.subr.mxu0 0.0
      %710 = vmatpush1.msra.mxu0 0.0
      %711 = vmatprep.subr.mxu0 0.0
      %712 = vmatpush1.msra.mxu0 0.0
      %713 = vmatprep.subr.mxu0 0.0
      %714 = vmatpush1.msra.mxu0 0.0
      %715 = vmatprep.subr.mxu0 0.0
      %716 = vmatpush1.msra.mxu0 0.0
      %717 = vmatprep.subr.mxu0 0.0
      %718 = vmatpush1.msra.mxu0 0.0
      %719 = vmatprep.subr.mxu0 0.0
      %720 = vmatpush1.msra.mxu0 0.0
      %721 = vmatprep.subr.mxu0 0.0
      %722 = vmatpush1.msra.mxu0 0.0
      %723 = vmatprep.subr.mxu0 0.0
      %724 = vmatpush1.msra.mxu0 0.0
      %725 = vmatprep.subr.mxu0 0.0
      %726 = vmatpush1.msra.mxu0 0.0
      %727 = vmatprep.subr.mxu0 0.0
      %728 = vmatpush1.msra.mxu0 0.0
      %729 = vmatprep.subr.mxu0 0.0
      %730 = vmatpush1.msra.mxu0 0.0
      %731 = vmatprep.subr.mxu0 0.0
      %732 = vmatpush1.msra.mxu0 0.0
      %733 = vmatprep.subr.mxu0 0.0
      %734 = vmatpush1.msra.mxu0 0.0
      %735 = vmatprep.subr.mxu0 0.0
      %736 = vmatpush1.msra.mxu0 0.0
      %737 = vmatprep.subr.mxu0 0.0
      %738 = vmatpush1.msra.mxu0 0.0
      %739 = vmatprep.subr.mxu0 0.0
      %740 = vmatpush1.msra.mxu0 0.0
      %741 = vmatprep.subr.mxu0 0.0
      %742 = vmatpush1.msra.mxu0 0.0
      %743 = vmatprep.subr.mxu0 0.0
      %744 = vmatpush1.msra.mxu0 0.0
      %745 = vmatprep.subr.mxu0 0.0
      %746 = vmatpush1.msra.mxu0 0.0
      %747 = vmatprep.subr.mxu0 0.0
      %748 = vmatpush1.msra.mxu0 0.0
      %749 = vmatprep.subr.mxu0 0.0
      %750 = vmatpush1.msra.mxu0 0.0
      %751 = vmatprep.subr.mxu0 0.0
      %752 = vmatpush1.msra.mxu0 0.0
      %753 = vmatprep.subr.mxu0 0.0
      %754 = vmatpush1.msra.mxu0 0.0
      %755 = vmatprep.subr.mxu0 0.0
      %756 = vmatpush1.msra.mxu0 0.0
      %757 = vmatprep.subr.mxu0 0.0
      %758 = vmatpush1.msra.mxu0 0.0
      %759 = vmatprep.subr.mxu0 0.0
      %760 = vmatpush1.msra.mxu0 0.0
      %761 = vmatprep.subr.mxu0 0.0
      %762 = vmatpush1.msra.mxu0 0.0
      %763 = vmatprep.mubr.f32.mxu0 0.0
      %v764 = vand.u32 %v254, 4294901760
      %v765 = vsub.f32 %v254, %v764
      %766 = vmatmul.mubr.f32.gmra.mrb[0].mxu0 %v765
      %v767 = vpop.f32.mrb[0].mxu0
      %v768 = vadd.f32 %v604, %v767
      %v769 = vpop.f32.mrb[0].mxu0
      %770 = vmatprep.mubr.f32.mxu0 0.0
      %v771 = vand.u32 %v257, 4294901760
      %v772 = vsub.f32 %v257, %v771
      %773 = vmatmul.mubr.f32.gmra.mrb[0].mxu0 %v772
      %v774 = vpop.f32.mrb[0].mxu0
      %v775 = vadd.f32 %v610, %v774
      %v776 = vpop.f32.mrb[0].mxu0
      %777 = vmatprep.mubr.f32.mxu0 0.0
      %v778 = vand.u32 %v260, 4294901760
      %v779 = vsub.f32 %v260, %v778
      %780 = vmatmul.mubr.f32.gmra.mrb[0].mxu0 %v779
      %v781 = vpop.f32.mrb[0].mxu0
      %v782 = vadd.f32 %v616, %v781
      %v783 = vpop.f32.mrb[0].mxu0
      %784 = vmatprep.mubr.f32.mxu0 0.0
      %v785 = vand.u32 %v263, 4294901760
      %v786 = vsub.f32 %v263, %v785
      %787 = vmatmul.mubr.f32.gmra.mrb[0].mxu0 %v786
      %v788 = vpop.f32.mrb[0].mxu0
      %v789 = vadd.f32 %v622, %v788
      %v790 = vpop.f32.mrb[0].mxu0
      %791 = vmatprep.mubr.f32.mxu0 0.0
      %v792 = vand.u32 %v266, 4294901760
      %v793 = vsub.f32 %v266, %v792
      %794 = vmatmul.mubr.f32.gmra.mrb[0].mxu0 %v793
      %v795 = vpop.f32.mrb[0].mxu0
      %v796 = vadd.f32 %v628, %v795
      %v797 = vpop.f32.mrb[0].mxu0
      %798 = vmatprep.mubr.f32.mxu0 0.0
      %v799 = vand.u32 %v269, 4294901760
      %v800 = vsub.f32 %v269, %v799
      %801 = vmatmul.mubr.f32.gmra.mrb[0].mxu0 %v800
      %v802 = vpop.f32.mrb[0].mxu0
      %v803 = vadd.f32 %v634, %v802
      %v804 = vpop.f32.mrb[0].mxu0
      %805 = vmatprep.mubr.f32.mxu0 0.0
      %v806 = vand.u32 %v272, 4294901760
      %v807 = vsub.f32 %v272, %v806
      %808 = vmatmul.mubr.f32.gmra.mrb[0].mxu0 %v807
      %v809 = vpop.f32.mrb[0].mxu0
      %v810 = vadd.f32 %v640, %v809
      %v811 = vpop.f32.mrb[0].mxu0
      %812 = vmatprep.mubr.f32.mxu0 0.0
      %v813 = vand.u32 %v275, 4294901760
      %v814 = vsub.f32 %v275, %v813
      %815 = vmatmul.mubr.f32.gmra.mrb[0].mxu0 %v814
      %v816 = vpop.f32.mrb[0].mxu0
      %v817 = vadd.f32 %v646, %v816
      %v818 = vpop.f32.mrb[0].mxu0
      %819 = vmatprep.mubr.f32.mxu0 0.0
      %v820 = vand.u32 %v278, 4294901760
      %v821 = vsub.f32 %v278, %v820
      %822 = vmatmul.mubr.f32.gmra.mrb[0].mxu0 %v821
      %v823 = vpop.f32.mrb[0].mxu0
      %v824 = vadd.f32 %v652, %v823
      %v825 = vpop.f32.mrb[0].mxu0
      %826 = vmatprep.mubr.f32.mxu0 0.0
      %v827 = vand.u32 %v281, 4294901760
      %v828 = vsub.f32 %v281, %v827
      %829 = vmatmul.mubr.f32.gmra.mrb[0].mxu0 %v828
      %v830 = vpop.f32.mrb[0].mxu0
      %v831 = vadd.f32 %v658, %v830
      %v832 = vpop.f32.mrb[0].mxu0
      %833 = vmatprep.mubr.f32.mxu0 0.0
      %v834 = vand.u32 %v284, 4294901760
      %v835 = vsub.f32 %v284, %v834
      %836 = vmatmul.mubr.f32.gmra.mrb[0].mxu0 %v835
      %v837 = vpop.f32.mrb[0].mxu0
      %v838 = vadd.f32 %v664, %v837
      %v839 = vpop.f32.mrb[0].mxu0
      %840 = vmatprep.mubr.f32.mxu0 0.0
      %v841 = vand.u32 %v287, 4294901760
      %v842 = vsub.f32 %v287, %v841
      %843 = vmatmul.mubr.f32.gmra.mrb[0].mxu0 %v842
      %v844 = vpop.f32.mrb[0].mxu0
      %v845 = vadd.f32 %v670, %v844
      %v846 = vpop.f32.mrb[0].mxu0
      %847 = vmatprep.mubr.f32.mxu0 0.0
      %v848 = vand.u32 %v290, 4294901760
      %v849 = vsub.f32 %v290, %v848
      %850 = vmatmul.mubr.f32.gmra.mrb[0].mxu0 %v849
      %v851 = vpop.f32.mrb[0].mxu0
      %v852 = vadd.f32 %v676, %v851
      %v853 = vpop.f32.mrb[0].mxu0
      %854 = vmatprep.mubr.f32.mxu0 0.0
      %v855 = vand.u32 %v293, 4294901760
      %v856 = vsub.f32 %v293, %v855
      %857 = vmatmul.mubr.f32.gmra.mrb[0].mxu0 %v856
      %v858 = vpop.f32.mrb[0].mxu0
      %v859 = vadd.f32 %v682, %v858
      %v860 = vpop.f32.mrb[0].mxu0
      %861 = vmatprep.mubr.f32.mxu0 0.0
      %v862 = vand.u32 %v296, 4294901760
      %v863 = vsub.f32 %v296, %v862
      %864 = vmatmul.mubr.f32.gmra.mrb[0].mxu0 %v863
      %v865 = vpop.f32.mrb[0].mxu0
      %v866 = vadd.f32 %v688, %v865
      %v867 = vpop.f32.mrb[0].mxu0
      %868 = vmatprep.mubr.f32.mxu0 0.0
      %v869 = vand.u32 %v299, 4294901760
      %v870 = vsub.f32 %v299, %v869
      %871 = vmatmul.mubr.f32.gmra.mrb[0].mxu0 %v870
      %v872 = vpop.f32.mrb[0].mxu0
      %v873 = vadd.f32 %v694, %v872
      %v874 = vpop.f32.mrb[0].mxu0
      %875 = vdwg.mxu0
      %876 = vmatprep.subr.mxu0 0.0
      %v877 = vand.u32 %v303, 4294901760
      %878 = vmatpush1.msra.mxu0 %v877
      %879 = vmatprep.subr.mxu0 0.0
      %880 = vmatpush1.msra.mxu0 0.0
      %881 = vmatprep.subr.mxu0 0.0
      %882 = vmatpush1.msra.mxu0 0.0
      %883 = vmatprep.subr.mxu0 0.0
      %884 = vmatpush1.msra.mxu0 0.0
      %885 = vmatprep.subr.mxu0 0.0
      %886 = vmatpush1.msra.mxu0 0.0
      %887 = vmatprep.subr.mxu0 0.0
      %888 = vmatpush1.msra.mxu0 0.0
      %889 = vmatprep.subr.mxu0 0.0
      %890 = vmatpush1.msra.mxu0 0.0
      %891 = vmatprep.subr.mxu0 0.0
      %892 = vmatpush1.msra.mxu0 0.0
      %893 = vmatprep.subr.mxu0 0.0
      %894 = vmatpush1.msra.mxu0 0.0
      %895 = vmatprep.subr.mxu0 0.0
      %896 = vmatpush1.msra.mxu0 0.0
      %897 = vmatprep.subr.mxu0 0.0
      %898 = vmatpush1.msra.mxu0 0.0
      %899 = vmatprep.subr.mxu0 0.0
      %900 = vmatpush1.msra.mxu0 0.0
      %901 = vmatprep.subr.mxu0 0.0
      %902 = vmatpush1.msra.mxu0 0.0
      %903 = vmatprep.subr.mxu0 0.0
      %904 = vmatpush1.msra.mxu0 0.0
      %905 = vmatprep.subr.mxu0 0.0
      %906 = vmatpush1.msra.mxu0 0.0
      %907 = vmatprep.subr.mxu0 0.0
      %908 = vmatpush1.msra.mxu0 0.0
      %909 = vmatprep.subr.mxu0 0.0
      %910 = vmatpush1.msra.mxu0 0.0
      %911 = vmatprep.subr.mxu0 0.0
      %912 = vmatpush1.msra.mxu0 0.0
      %913 = vmatprep.subr.mxu0 0.0
      %914 = vmatpush1.msra.mxu0 0.0
      %915 = vmatprep.subr.mxu0 0.0
      %916 = vmatpush1.msra.mxu0 0.0
      %917 = vmatprep.subr.mxu0 0.0
      %918 = vmatpush1.msra.mxu0 0.0
      %919 = vmatprep.subr.mxu0 0.0
      %920 = vmatpush1.msra.mxu0 0.0
      %921 = vmatprep.subr.mxu0 0.0
      %922 = vmatpush1.msra.mxu0 0.0
      %923 = vmatprep.subr.mxu0 0.0
      %924 = vmatpush1.msra.mxu0 0.0
      %925 = vmatprep.subr.mxu0 0.0
      %926 = vmatpush1.msra.mxu0 0.0
      %927 = vmatprep.subr.mxu0 0.0
      %928 = vmatpush1.msra.mxu0 0.0
      %929 = vmatprep.subr.mxu0 0.0
      %930 = vmatpush1.msra.mxu0 0.0
      %931 = vmatprep.subr.mxu0 0.0
      %932 = vmatpush1.msra.mxu0 0.0
      %933 = vmatprep.subr.mxu0 0.0
      %934 = vmatpush1.msra.mxu0 0.0
      %935 = vmatprep.subr.mxu0 0.0
      %936 = vmatpush1.msra.mxu0 0.0
      %937 = vmatprep.subr.mxu0 0.0
      %938 = vmatpush1.msra.mxu0 0.0
      %939 = vmatprep.subr.mxu0 0.0
      %940 = vmatpush1.msra.mxu0 0.0
      %941 = vmatprep.mubr.f32.mxu0 0.0
      %v942 = vand.u32 %v254, 4294901760
      %v943 = vsub.f32 %v254, %v942
      %v944 = vand.u32 %v943, 4294901760
      %945 = vmatmul.mubr.f32.gmra.mrb[0].mxu0 %v944
      %v946 = vpop.f32.mrb[0].mxu0
      %v947 = vadd.f32 %v768, %v946
      %v948 = vpop.f32.mrb[0].mxu0
      %949 = vmatprep.mubr.f32.mxu0 0.0
      %v950 = vand.u32 %v257, 4294901760
      %v951 = vsub.f32 %v257, %v950
      %v952 = vand.u32 %v951, 4294901760
      %953 = vmatmul.mubr.f32.gmra.mrb[0].mxu0 %v952
      %v954 = vpop.f32.mrb[0].mxu0
      %v955 = vadd.f32 %v775, %v954
      %v956 = vpop.f32.mrb[0].mxu0
      %957 = vmatprep.mubr.f32.mxu0 0.0
      %v958 = vand.u32 %v260, 4294901760
      %v959 = vsub.f32 %v260, %v958
      %v960 = vand.u32 %v959, 4294901760
      %961 = vmatmul.mubr.f32.gmra.mrb[0].mxu0 %v960
      %v962 = vpop.f32.mrb[0].mxu0
      %v963 = vadd.f32 %v782, %v962
      %v964 = vpop.f32.mrb[0].mxu0
      %965 = vmatprep.mubr.f32.mxu0 0.0
      %v966 = vand.u32 %v263, 4294901760
      %v967 = vsub.f32 %v263, %v966
      %v968 = vand.u32 %v967, 4294901760
      %969 = vmatmul.mubr.f32.gmra.mrb[0].mxu0 %v968
      %v970 = vpop.f32.mrb[0].mxu0
      %v971 = vadd.f32 %v789, %v970
      %v972 = vpop.f32.mrb[0].mxu0
      %973 = vmatprep.mubr.f32.mxu0 0.0
      %v974 = vand.u32 %v266, 4294901760
      %v975 = vsub.f32 %v266, %v974
      %v976 = vand.u32 %v975, 4294901760
      %977 = vmatmul.mubr.f32.gmra.mrb[0].mxu0 %v976
      %v978 = vpop.f32.mrb[0].mxu0
      %v979 = vadd.f32 %v796, %v978
      %v980 = vpop.f32.mrb[0].mxu0
      %981 = vmatprep.mubr.f32.mxu0 0.0
      %v982 = vand.u32 %v269, 4294901760
      %v983 = vsub.f32 %v269, %v982
      %v984 = vand.u32 %v983, 4294901760
      %985 = vmatmul.mubr.f32.gmra.mrb[0].mxu0 %v984
      %v986 = vpop.f32.mrb[0].mxu0
      %v987 = vadd.f32 %v803, %v986
      %v988 = vpop.f32.mrb[0].mxu0
      %989 = vmatprep.mubr.f32.mxu0 0.0
      %v990 = vand.u32 %v272, 4294901760
      %v991 = vsub.f32 %v272, %v990
      %v992 = vand.u32 %v991, 4294901760
      %993 = vmatmul.mubr.f32.gmra.mrb[0].mxu0 %v992
      %v994 = vpop.f32.mrb[0].mxu0
      %v995 = vadd.f32 %v810, %v994
      %v996 = vpop.f32.mrb[0].mxu0
      %997 = vmatprep.mubr.f32.mxu0 0.0
      %v998 = vand.u32 %v275, 4294901760
      %v999 = vsub.f32 %v275, %v998
      %v1000 = vand.u32 %v999, 4294901760
      %1001 = vmatmul.mubr.f32.gmra.mrb[0].mxu0 %v1000
      %v1002 = vpop.f32.mrb[0].mxu0
      %v1003 = vadd.f32 %v817, %v1002
      %v1004 = vpop.f32.mrb[0].mxu0
      %1005 = vmatprep.mubr.f32.mxu0 0.0
      %v1006 = vand.u32 %v278, 4294901760
      %v1007 = vsub.f32 %v278, %v1006
      %v1008 = vand.u32 %v1007, 4294901760
      %1009 = vmatmul.mubr.f32.gmra.mrb[0].mxu0 %v1008
      %v1010 = vpop.f32.mrb[0].mxu0
      %v1011 = vadd.f32 %v824, %v1010
      %v1012 = vpop.f32.mrb[0].mxu0
      %1013 = vmatprep.mubr.f32.mxu0 0.0
      %v1014 = vand.u32 %v281, 4294901760
      %v1015 = vsub.f32 %v281, %v1014
      %v1016 = vand.u32 %v1015, 4294901760
      %1017 = vmatmul.mubr.f32.gmra.mrb[0].mxu0 %v1016
      %v1018 = vpop.f32.mrb[0].mxu0
      %v1019 = vadd.f32 %v831, %v1018
      %v1020 = vpop.f32.mrb[0].mxu0
      %1021 = vmatprep.mubr.f32.mxu0 0.0
      %v1022 = vand.u32 %v284, 4294901760
      %v1023 = vsub.f32 %v284, %v1022
      %v1024 = vand.u32 %v1023, 4294901760
      %1025 = vmatmul.mubr.f32.gmra.mrb[0].mxu0 %v1024
      %v1026 = vpop.f32.mrb[0].mxu0
      %v1027 = vadd.f32 %v838, %v1026
      %v1028 = vpop.f32.mrb[0].mxu0
      %1029 = vmatprep.mubr.f32.mxu0 0.0
      %v1030 = vand.u32 %v287, 4294901760
      %v1031 = vsub.f32 %v287, %v1030
      %v1032 = vand.u32 %v1031, 4294901760
      %1033 = vmatmul.mubr.f32.gmra.mrb[0].mxu0 %v1032
      %v1034 = vpop.f32.mrb[0].mxu0
      %v1035 = vadd.f32 %v845, %v1034
      %v1036 = vpop.f32.mrb[0].mxu0
      %1037 = vmatprep.mubr.f32.mxu0 0.0
      %v1038 = vand.u32 %v290, 4294901760
      %v1039 = vsub.f32 %v290, %v1038
      %v1040 = vand.u32 %v1039, 4294901760
      %1041 = vmatmul.mubr.f32.gmra.mrb[0].mxu0 %v1040
      %v1042 = vpop.f32.mrb[0].mxu0
      %v1043 = vadd.f32 %v852, %v1042
      %v1044 = vpop.f32.mrb[0].mxu0
      %1045 = vmatprep.mubr.f32.mxu0 0.0
      %v1046 = vand.u32 %v293, 4294901760
      %v1047 = vsub.f32 %v293, %v1046
      %v1048 = vand.u32 %v1047, 4294901760
      %1049 = vmatmul.mubr.f32.gmra.mrb[0].mxu0 %v1048
      %v1050 = vpop.f32.mrb[0].mxu0
      %v1051 = vadd.f32 %v859, %v1050
      %v1052 = vpop.f32.mrb[0].mxu0
      %1053 = vmatprep.mubr.f32.mxu0 0.0
      %v1054 = vand.u32 %v296, 4294901760
      %v1055 = vsub.f32 %v296, %v1054
      %v1056 = vand.u32 %v1055, 4294901760
      %1057 = vmatmul.mubr.f32.gmra.mrb[0].mxu0 %v1056
      %v1058 = vpop.f32.mrb[0].mxu0
      %v1059 = vadd.f32 %v866, %v1058
      %v1060 = vpop.f32.mrb[0].mxu0
      %1061 = vmatprep.mubr.f32.mxu0 0.0
      %v1062 = vand.u32 %v299, 4294901760
      %v1063 = vsub.f32 %v299, %v1062
      %v1064 = vand.u32 %v1063, 4294901760
      %1065 = vmatmul.mubr.f32.gmra.mrb[0].mxu0 %v1064
      %v1066 = vpop.f32.mrb[0].mxu0
      %v1067 = vadd.f32 %v873, %v1066
      %v1068 = vpop.f32.mrb[0].mxu0
      %1069 = vdwg.mxu0
      %1070 = vmatprep.subr.mxu0 0.0
      %v1071 = vand.u32 %v303, 4294901760
      %v1072 = vsub.f32 %v303, %v1071
      %v1073 = vand.u32 %v1072, 4294901760
      %1074 = vmatpush1.msra.mxu0 %v1073
      %1075 = vmatprep.subr.mxu0 0.0
      %1076 = vmatpush1.msra.mxu0 0.0
      %1077 = vmatprep.subr.mxu0 0.0
      %1078 = vmatpush1.msra.mxu0 0.0
      %1079 = vmatprep.subr.mxu0 0.0
      %1080 = vmatpush1.msra.mxu0 0.0
      %1081 = vmatprep.subr.mxu0 0.0
      %1082 = vmatpush1.msra.mxu0 0.0
      %1083 = vmatprep.subr.mxu0 0.0
      %1084 = vmatpush1.msra.mxu0 0.0
      %1085 = vmatprep.subr.mxu0 0.0
      %1086 = vmatpush1.msra.mxu0 0.0
      %1087 = vmatprep.subr.mxu0 0.0
      %1088 = vmatpush1.msra.mxu0 0.0
      %1089 = vmatprep.subr.mxu0 0.0
      %1090 = vmatpush1.msra.mxu0 0.0
      %1091 = vmatprep.subr.mxu0 0.0
      %1092 = vmatpush1.msra.mxu0 0.0
      %1093 = vmatprep.subr.mxu0 0.0
      %1094 = vmatpush1.msra.mxu0 0.0
      %1095 = vmatprep.subr.mxu0 0.0
      %1096 = vmatpush1.msra.mxu0 0.0
      %1097 = vmatprep.subr.mxu0 0.0
      %1098 = vmatpush1.msra.mxu0 0.0
      %1099 = vmatprep.subr.mxu0 0.0
      %1100 = vmatpush1.msra.mxu0 0.0
      %1101 = vmatprep.subr.mxu0 0.0
      %1102 = vmatpush1.msra.mxu0 0.0
      %1103 = vmatprep.subr.mxu0 0.0
      %1104 = vmatpush1.msra.mxu0 0.0
      %1105 = vmatprep.subr.mxu0 0.0
      %1106 = vmatpush1.msra.mxu0 0.0
      %1107 = vmatprep.subr.mxu0 0.0
      %1108 = vmatpush1.msra.mxu0 0.0
      %1109 = vmatprep.subr.mxu0 0.0
      %1110 = vmatpush1.msra.mxu0 0.0
      %1111 = vmatprep.subr.mxu0 0.0
      %1112 = vmatpush1.msra.mxu0 0.0
      %1113 = vmatprep.subr.mxu0 0.0
      %1114 = vmatpush1.msra.mxu0 0.0
      %1115 = vmatprep.subr.mxu0 0.0
      %1116 = vmatpush1.msra.mxu0 0.0
      %1117 = vmatprep.subr.mxu0 0.0
      %1118 = vmatpush1.msra.mxu0 0.0
      %1119 = vmatprep.subr.mxu0 0.0
      %1120 = vmatpush1.msra.mxu0 0.0
      %1121 = vmatprep.subr.mxu0 0.0
      %1122 = vmatpush1.msra.mxu0 0.0
      %1123 = vmatprep.subr.mxu0 0.0
      %1124 = vmatpush1.msra.mxu0 0.0
      %1125 = vmatprep.subr.mxu0 0.0
      %1126 = vmatpush1.msra.mxu0 0.0
      %1127 = vmatprep.subr.mxu0 0.0
      %1128 = vmatpush1.msra.mxu0 0.0
      %1129 = vmatprep.subr.mxu0 0.0
      %1130 = vmatpush1.msra.mxu0 0.0
      %1131 = vmatprep.subr.mxu0 0.0
      %1132 = vmatpush1.msra.mxu0 0.0
      %1133 = vmatprep.subr.mxu0 0.0
      %1134 = vmatpush1.msra.mxu0 0.0
      %1135 = vmatprep.subr.mxu0 0.0
      %1136 = vmatpush1.msra.mxu0 0.0
      %1137 = vmatprep.mubr.f32.mxu0 0.0
      %v1138 = vand.u32 %v254, 4294901760
      %1139 = vmatmul.mubr.f32.gmra.mrb[0].mxu0 %v1138
      %v1140 = vpop.f32.mrb[0].mxu0
      %v1141 = vadd.f32 %v947, %v1140
      %v1142 = vpop.f32.mrb[0].mxu0
      %1143 = vmatprep.mubr.f32.mxu0 0.0
      %v1144 = vand.u32 %v257, 4294901760
      %1145 = vmatmul.mubr.f32.gmra.mrb[0].mxu0 %v1144
      %v1146 = vpop.f32.mrb[0].mxu0
      %v1147 = vadd.f32 %v955, %v1146
      %v1148 = vpop.f32.mrb[0].mxu0
      %1149 = vmatprep.mubr.f32.mxu0 0.0
      %v1150 = vand.u32 %v260, 4294901760
      %1151 = vmatmul.mubr.f32.gmra.mrb[0].mxu0 %v1150
      %v1152 = vpop.f32.mrb[0].mxu0
      %v1153 = vadd.f32 %v963, %v1152
      %v1154 = vpop.f32.mrb[0].mxu0
      %1155 = vmatprep.mubr.f32.mxu0 0.0
      %v1156 = vand.u32 %v263, 4294901760
      %1157 = vmatmul.mubr.f32.gmra.mrb[0].mxu0 %v1156
      %v1158 = vpop.f32.mrb[0].mxu0
      %v1159 = vadd.f32 %v971, %v1158
      %v1160 = vpop.f32.mrb[0].mxu0
      %1161 = vmatprep.mubr.f32.mxu0 0.0
      %v1162 = vand.u32 %v266, 4294901760
      %1163 = vmatmul.mubr.f32.gmra.mrb[0].mxu0 %v1162
      %v1164 = vpop.f32.mrb[0].mxu0
      %v1165 = vadd.f32 %v979, %v1164
      %v1166 = vpop.f32.mrb[0].mxu0
      %1167 = vmatprep.mubr.f32.mxu0 0.0
      %v1168 = vand.u32 %v269, 4294901760
      %1169 = vmatmul.mubr.f32.gmra.mrb[0].mxu0 %v1168
      %v1170 = vpop.f32.mrb[0].mxu0
      %v1171 = vadd.f32 %v987, %v1170
      %v1172 = vpop.f32.mrb[0].mxu0
      %1173 = vmatprep.mubr.f32.mxu0 0.0
      %v1174 = vand.u32 %v272, 4294901760
      %1175 = vmatmul.mubr.f32.gmra.mrb[0].mxu0 %v1174
      %v1176 = vpop.f32.mrb[0].mxu0
      %v1177 = vadd.f32 %v995, %v1176
      %v1178 = vpop.f32.mrb[0].mxu0
      %1179 = vmatprep.mubr.f32.mxu0 0.0
      %v1180 = vand.u32 %v275, 4294901760
      %1181 = vmatmul.mubr.f32.gmra.mrb[0].mxu0 %v1180
      %v1182 = vpop.f32.mrb[0].mxu0
      %v1183 = vadd.f32 %v1003, %v1182
      %v1184 = vpop.f32.mrb[0].mxu0
      %1185 = vmatprep.mubr.f32.mxu0 0.0
      %v1186 = vand.u32 %v278, 4294901760
      %1187 = vmatmul.mubr.f32.gmra.mrb[0].mxu0 %v1186
      %v1188 = vpop.f32.mrb[0].mxu0
      %v1189 = vadd.f32 %v1011, %v1188
      %v1190 = vpop.f32.mrb[0].mxu0
      %1191 = vmatprep.mubr.f32.mxu0 0.0
      %v1192 = vand.u32 %v281, 4294901760
      %1193 = vmatmul.mubr.f32.gmra.mrb[0].mxu0 %v1192
      %v1194 = vpop.f32.mrb[0].mxu0
      %v1195 = vadd.f32 %v1019, %v1194
      %v1196 = vpop.f32.mrb[0].mxu0
      %1197 = vmatprep.mubr.f32.mxu0 0.0
      %v1198 = vand.u32 %v284, 4294901760
      %1199 = vmatmul.mubr.f32.gmra.mrb[0].mxu0 %v1198
      %v1200 = vpop.f32.mrb[0].mxu0
      %v1201 = vadd.f32 %v1027, %v1200
      %v1202 = vpop.f32.mrb[0].mxu0
      %1203 = vmatprep.mubr.f32.mxu0 0.0
      %v1204 = vand.u32 %v287, 4294901760
      %1205 = vmatmul.mubr.f32.gmra.mrb[0].mxu0 %v1204
      %v1206 = vpop.f32.mrb[0].mxu0
      %v1207 = vadd.f32 %v1035, %v1206
      %v1208 = vpop.f32.mrb[0].mxu0
      %1209 = vmatprep.mubr.f32.mxu0 0.0
      %v1210 = vand.u32 %v290, 4294901760
      %1211 = vmatmul.mubr.f32.gmra.mrb[0].mxu0 %v1210
      %v1212 = vpop.f32.mrb[0].mxu0
      %v1213 = vadd.f32 %v1043, %v1212
      %v1214 = vpop.f32.mrb[0].mxu0
      %1215 = vmatprep.mubr.f32.mxu0 0.0
      %v1216 = vand.u32 %v293, 4294901760
      %1217 = vmatmul.mubr.f32.gmra.mrb[0].mxu0 %v1216
      %v1218 = vpop.f32.mrb[0].mxu0
      %v1219 = vadd.f32 %v1051, %v1218
      %v1220 = vpop.f32.mrb[0].mxu0
      %1221 = vmatprep.mubr.f32.mxu0 0.0
      %v1222 = vand.u32 %v296, 4294901760
      %1223 = vmatmul.mubr.f32.gmra.mrb[0].mxu0 %v1222
      %v1224 = vpop.f32.mrb[0].mxu0
      %v1225 = vadd.f32 %v1059, %v1224
      %v1226 = vpop.f32.mrb[0].mxu0
      %1227 = vmatprep.mubr.f32.mxu0 0.0
      %v1228 = vand.u32 %v299, 4294901760
      %1229 = vmatmul.mubr.f32.gmra.mrb[0].mxu0 %v1228
      %v1230 = vpop.f32.mrb[0].mxu0
      %v1231 = vadd.f32 %v1067, %v1230
      %v1232 = vpop.f32.mrb[0].mxu0
      %1233 = vdwg.mxu0
      %1234 = vmatprep.subr.mxu0 0.0
      %v1235 = vand.u32 %v303, 4294901760
      %1236 = vmatpush1.msra.mxu0 %v1235
      %1237 = vmatprep.subr.mxu0 0.0
      %1238 = vmatpush1.msra.mxu0 0.0
      %1239 = vmatprep.subr.mxu0 0.0
      %1240 = vmatpush1.msra.mxu0 0.0
      %1241 = vmatprep.subr.mxu0 0.0
      %1242 = vmatpush1.msra.mxu0 0.0
      %1243 = vmatprep.subr.mxu0 0.0
      %1244 = vmatpush1.msra.mxu0 0.0
      %1245 = vmatprep.subr.mxu0 0.0
      %1246 = vmatpush1.msra.mxu0 0.0
      %1247 = vmatprep.subr.mxu0 0.0
      %1248 = vmatpush1.msra.mxu0 0.0
      %1249 = vmatprep.subr.mxu0 0.0
      %1250 = vmatpush1.msra.mxu0 0.0
      %1251 = vmatprep.subr.mxu0 0.0
      %1252 = vmatpush1.msra.mxu0 0.0
      %1253 = vmatprep.subr.mxu0 0.0
      %1254 = vmatpush1.msra.mxu0 0.0
      %1255 = vmatprep.subr.mxu0 0.0
      %1256 = vmatpush1.msra.mxu0 0.0
      %1257 = vmatprep.subr.mxu0 0.0
      %1258 = vmatpush1.msra.mxu0 0.0
      %1259 = vmatprep.subr.mxu0 0.0
      %1260 = vmatpush1.msra.mxu0 0.0
      %1261 = vmatprep.subr.mxu0 0.0
      %1262 = vmatpush1.msra.mxu0 0.0
      %1263 = vmatprep.subr.mxu0 0.0
      %1264 = vmatpush1.msra.mxu0 0.0
      %1265 = vmatprep.subr.mxu0 0.0
      %1266 = vmatpush1.msra.mxu0 0.0
      %1267 = vmatprep.subr.mxu0 0.0
      %1268 = vmatpush1.msra.mxu0 0.0
      %1269 = vmatprep.subr.mxu0 0.0
      %1270 = vmatpush1.msra.mxu0 0.0
      %1271 = vmatprep.subr.mxu0 0.0
      %1272 = vmatpush1.msra.mxu0 0.0
      %1273 = vmatprep.subr.mxu0 0.0
      %1274 = vmatpush1.msra.mxu0 0.0
      %1275 = vmatprep.subr.mxu0 0.0
      %1276 = vmatpush1.msra.mxu0 0.0
      %1277 = vmatprep.subr.mxu0 0.0
      %1278 = vmatpush1.msra.mxu0 0.0
      %1279 = vmatprep.subr.mxu0 0.0
      %1280 = vmatpush1.msra.mxu0 0.0
      %1281 = vmatprep.subr.mxu0 0.0
      %1282 = vmatpush1.msra.mxu0 0.0
      %1283 = vmatprep.subr.mxu0 0.0
      %1284 = vmatpush1.msra.mxu0 0.0
      %1285 = vmatprep.subr.mxu0 0.0
      %1286 = vmatpush1.msra.mxu0 0.0
      %1287 = vmatprep.subr.mxu0 0.0
      %1288 = vmatpush1.msra.mxu0 0.0
      %1289 = vmatprep.subr.mxu0 0.0
      %1290 = vmatpush1.msra.mxu0 0.0
      %1291 = vmatprep.subr.mxu0 0.0
      %1292 = vmatpush1.msra.mxu0 0.0
      %1293 = vmatprep.subr.mxu0 0.0
      %1294 = vmatpush1.msra.mxu0 0.0
      %1295 = vmatprep.subr.mxu0 0.0
      %1296 = vmatpush1.msra.mxu0 0.0
      %1297 = vmatprep.subr.mxu0 0.0
      %1298 = vmatpush1.msra.mxu0 0.0
      %1299 = vmatprep.mubr.f32.mxu0 0.0
      %v1300 = vand.u32 %v254, 4294901760
      %1301 = vmatmul.mubr.f32.gmra.mrb[0].mxu0 %v1300
      %v1302 = vpop.f32.mrb[0].mxu0
      %v1303 = vadd.f32 %v1141, %v1302
      %v1304 = vpop.f32.mrb[0].mxu0
      %1305 = vmatprep.mubr.f32.mxu0 0.0
      %v1306 = vand.u32 %v257, 4294901760
      %1307 = vmatmul.mubr.f32.gmra.mrb[0].mxu0 %v1306
      %v1308 = vpop.f32.mrb[0].mxu0
      %v1309 = vadd.f32 %v1147, %v1308
      %v1310 = vpop.f32.mrb[0].mxu0
      %1311 = vmatprep.mubr.f32.mxu0 0.0
      %v1312 = vand.u32 %v260, 4294901760
      %1313 = vmatmul.mubr.f32.gmra.mrb[0].mxu0 %v1312
      %v1314 = vpop.f32.mrb[0].mxu0
      %v1315 = vadd.f32 %v1153, %v1314
      %v1316 = vpop.f32.mrb[0].mxu0
      %1317 = vmatprep.mubr.f32.mxu0 0.0
      %v1318 = vand.u32 %v263, 4294901760
      %1319 = vmatmul.mubr.f32.gmra.mrb[0].mxu0 %v1318
      %v1320 = vpop.f32.mrb[0].mxu0
      %v1321 = vadd.f32 %v1159, %v1320
      %v1322 = vpop.f32.mrb[0].mxu0
      %1323 = vmatprep.mubr.f32.mxu0 0.0
      %v1324 = vand.u32 %v266, 4294901760
      %1325 = vmatmul.mubr.f32.gmra.mrb[0].mxu0 %v1324
      %v1326 = vpop.f32.mrb[0].mxu0
      %v1327 = vadd.f32 %v1165, %v1326
      %v1328 = vpop.f32.mrb[0].mxu0
      %1329 = vmatprep.mubr.f32.mxu0 0.0
      %v1330 = vand.u32 %v269, 4294901760
      %1331 = vmatmul.mubr.f32.gmra.mrb[0].mxu0 %v1330
      %v1332 = vpop.f32.mrb[0].mxu0
      %v1333 = vadd.f32 %v1171, %v1332
      %v1334 = vpop.f32.mrb[0].mxu0
      %1335 = vmatprep.mubr.f32.mxu0 0.0
      %v1336 = vand.u32 %v272, 4294901760
      %1337 = vmatmul.mubr.f32.gmra.mrb[0].mxu0 %v1336
      %v1338 = vpop.f32.mrb[0].mxu0
      %v1339 = vadd.f32 %v1177, %v1338
      %v1340 = vpop.f32.mrb[0].mxu0
      %1341 = vmatprep.mubr.f32.mxu0 0.0
      %v1342 = vand.u32 %v275, 4294901760
      %1343 = vmatmul.mubr.f32.gmra.mrb[0].mxu0 %v1342
      %v1344 = vpop.f32.mrb[0].mxu0
      %v1345 = vadd.f32 %v1183, %v1344
      %v1346 = vpop.f32.mrb[0].mxu0
      %1347 = vmatprep.mubr.f32.mxu0 0.0
      %v1348 = vand.u32 %v278, 4294901760
      %1349 = vmatmul.mubr.f32.gmra.mrb[0].mxu0 %v1348
      %v1350 = vpop.f32.mrb[0].mxu0
      %v1351 = vadd.f32 %v1189, %v1350
      %v1352 = vpop.f32.mrb[0].mxu0
      %1353 = vmatprep.mubr.f32.mxu0 0.0
      %v1354 = vand.u32 %v281, 4294901760
      %1355 = vmatmul.mubr.f32.gmra.mrb[0].mxu0 %v1354
      %v1356 = vpop.f32.mrb[0].mxu0
      %v1357 = vadd.f32 %v1195, %v1356
      %v1358 = vpop.f32.mrb[0].mxu0
      %1359 = vmatprep.mubr.f32.mxu0 0.0
      %v1360 = vand.u32 %v284, 4294901760
      %1361 = vmatmul.mubr.f32.gmra.mrb[0].mxu0 %v1360
      %v1362 = vpop.f32.mrb[0].mxu0
      %v1363 = vadd.f32 %v1201, %v1362
      %v1364 = vpop.f32.mrb[0].mxu0
      %1365 = vmatprep.mubr.f32.mxu0 0.0
      %v1366 = vand.u32 %v287, 4294901760
      %1367 = vmatmul.mubr.f32.gmra.mrb[0].mxu0 %v1366
      %v1368 = vpop.f32.mrb[0].mxu0
      %v1369 = vadd.f32 %v1207, %v1368
      %v1370 = vpop.f32.mrb[0].mxu0
      %1371 = vmatprep.mubr.f32.mxu0 0.0
      %v1372 = vand.u32 %v290, 4294901760
      %1373 = vmatmul.mubr.f32.gmra.mrb[0].mxu0 %v1372
      %v1374 = vpop.f32.mrb[0].mxu0
      %v1375 = vadd.f32 %v1213, %v1374
      %v1376 = vpop.f32.mrb[0].mxu0
      %1377 = vmatprep.mubr.f32.mxu0 0.0
      %v1378 = vand.u32 %v293, 4294901760
      %1379 = vmatmul.mubr.f32.gmra.mrb[0].mxu0 %v1378
      %v1380 = vpop.f32.mrb[0].mxu0
      %v1381 = vadd.f32 %v1219, %v1380
      %v1382 = vpop.f32.mrb[0].mxu0
      %1383 = vmatprep.mubr.f32.mxu0 0.0
      %v1384 = vand.u32 %v296, 4294901760
      %1385 = vmatmul.mubr.f32.gmra.mrb[0].mxu0 %v1384
      %v1386 = vpop.f32.mrb[0].mxu0
      %v1387 = vadd.f32 %v1225, %v1386
      %v1388 = vpop.f32.mrb[0].mxu0
      %1389 = vmatprep.mubr.f32.mxu0 0.0
      %v1390 = vand.u32 %v299, 4294901760
      %1391 = vmatmul.mubr.f32.gmra.mrb[0].mxu0 %v1390
      %v1392 = vpop.f32.mrb[0].mxu0
      %v1393 = vadd.f32 %v1231, %v1392
      %v1394 = vpop.f32.mrb[0].mxu0
      %1395 = vdwg.mxu0
      %v1396 = vxor.u32 %v1303, 2147483648
      %v1397 = vxor.u32 %v1309, 2147483648
      %v1398 = vxor.u32 %v1315, 2147483648
      %v1399 = vxor.u32 %v1321, 2147483648
      %v1400 = vxor.u32 %v1327, 2147483648
      %v1401 = vxor.u32 %v1333, 2147483648
      %v1402 = vxor.u32 %v1339, 2147483648
      %v1403 = vxor.u32 %v1345, 2147483648
      %v1404 = vxor.u32 %v1351, 2147483648
      %v1405 = vxor.u32 %v1357, 2147483648
      %v1406 = vxor.u32 %v1363, 2147483648
      %v1407 = vxor.u32 %v1369, 2147483648
      %v1408 = vxor.u32 %v1375, 2147483648
      %v1409 = vxor.u32 %v1381, 2147483648
      %v1410 = vxor.u32 %v1387, 2147483648
      %v1411 = vxor.u32 %v1393, 2147483648
      %v1412 = vmul.f32 %v1396, 1.442695
      %v1413 = vpow.pop %v1412
      %v1414 = vmul.f32 %v1397, 1.442695
      %v1415 = vpow.pop %v1414
      %v1416 = vmul.f32 %v1398, 1.442695
      %v1417 = vpow.pop %v1416
      %v1418 = vmul.f32 %v1399, 1.442695
      %v1419 = vpow.pop %v1418
      %v1420 = vmul.f32 %v1400, 1.442695
      %v1421 = vpow.pop %v1420
      %v1422 = vmul.f32 %v1401, 1.442695
      %v1423 = vpow.pop %v1422
      %v1424 = vmul.f32 %v1402, 1.442695
      %v1425 = vpow.pop %v1424
      %v1426 = vmul.f32 %v1403, 1.442695
      %v1427 = vpow.pop %v1426
      %v1428 = vmul.f32 %v1404, 1.442695
      %v1429 = vpow.pop %v1428
      %v1430 = vmul.f32 %v1405, 1.442695
      %v1431 = vpow.pop %v1430
      %v1432 = vmul.f32 %v1406, 1.442695
      %v1433 = vpow.pop %v1432
      %v1434 = vmul.f32 %v1407, 1.442695
      %v1435 = vpow.pop %v1434
      %v1436 = vmul.f32 %v1408, 1.442695
      %v1437 = vpow.pop %v1436
      %v1438 = vmul.f32 %v1409, 1.442695
      %v1439 = vpow.pop %v1438
      %v1440 = vmul.f32 %v1410, 1.442695
      %v1441 = vpow.pop %v1440
      %v1442 = vmul.f32 %v1411, 1.442695
      %v1443 = vpow.pop %v1442
      %v1444 = vadd.f32 %v1413, 1.0
      %v1445 = vadd.f32 %v1415, 1.0
      %v1446 = vadd.f32 %v1417, 1.0
      %v1447 = vadd.f32 %v1419, 1.0
      %v1448 = vadd.f32 %v1421, 1.0
      %v1449 = vadd.f32 %v1423, 1.0
      %v1450 = vadd.f32 %v1425, 1.0
      %v1451 = vadd.f32 %v1427, 1.0
      %v1452 = vadd.f32 %v1429, 1.0
      %v1453 = vadd.f32 %v1431, 1.0
      %v1454 = vadd.f32 %v1433, 1.0
      %v1455 = vadd.f32 %v1435, 1.0
      %v1456 = vadd.f32 %v1437, 1.0
      %v1457 = vadd.f32 %v1439, 1.0
      %v1458 = vadd.f32 %v1441, 1.0
      %v1459 = vadd.f32 %v1443, 1.0
      %v1460 = vrcp.pop %v1444
      %v1461 = vmul.f32 1.0, %v1460
      %v1462 = vrcp.pop %v1445
      %v1463 = vmul.f32 1.0, %v1462
      %v1464 = vrcp.pop %v1446
      %v1465 = vmul.f32 1.0, %v1464
      %v1466 = vrcp.pop %v1447
      %v1467 = vmul.f32 1.0, %v1466
      %v1468 = vrcp.pop %v1448
      %v1469 = vmul.f32 1.0, %v1468
      %v1470 = vrcp.pop %v1449
      %v1471 = vmul.f32 1.0, %v1470
      %v1472 = vrcp.pop %v1450
      %v1473 = vmul.f32 1.0, %v1472
      %v1474 = vrcp.pop %v1451
      %v1475 = vmul.f32 1.0, %v1474
      %v1476 = vrcp.pop %v1452
      %v1477 = vmul.f32 1.0, %v1476
      %v1478 = vrcp.pop %v1453
      %v1479 = vmul.f32 1.0, %v1478
      %v1480 = vrcp.pop %v1454
      %v1481 = vmul.f32 1.0, %v1480
      %v1482 = vrcp.pop %v1455
      %v1483 = vmul.f32 1.0, %v1482
      %v1484 = vrcp.pop %v1456
      %v1485 = vmul.f32 1.0, %v1484
      %v1486 = vrcp.pop %v1457
      %v1487 = vmul.f32 1.0, %v1486
      %v1488 = vrcp.pop %v1458
      %v1489 = vmul.f32 1.0, %v1488
      %v1490 = vrcp.pop %v1459
      %v1491 = vmul.f32 1.0, %v1490
      %v1492 = vld [vmem:[%s3] sm:$0xff]
      %v1493 = vld [vmem:[%s3 + $0x8] sm:$0xff]
      %v1494 = vld [vmem:[%s4] sm:$0x1]
      %v1496 = vlaneseq
      %v1497 = vshrl.u32 %v1496, 7
      %v1498 = vsub.s32 0, %v1497
      %v1499 = vrot.slane %v1494, %v1498
      %vm1501 = vcmask 130048
      %v1503 = vsel %vm1501, %v1461, 0
      %v1506 = vsel %vm1501, %v1463, 0
      %v1509 = vsel %vm1501, %v1465, 0
      %v1512 = vsel %vm1501, %v1467, 0
      %v1515 = vsel %vm1501, %v1469, 0
      %v1518 = vsel %vm1501, %v1471, 0
      %v1521 = vsel %vm1501, %v1473, 0
      %v1524 = vsel %vm1501, %v1475, 0
      %v1527 = vsel %vm1501, %v1477, 0
      %v1530 = vsel %vm1501, %v1479, 0
      %v1533 = vsel %vm1501, %v1481, 0
      %v1536 = vsel %vm1501, %v1483, 0
      %v1539 = vsel %vm1501, %v1485, 0
      %v1542 = vsel %vm1501, %v1487, 0
      %v1545 = vsel %vm1501, %v1489, 0
      %v1548 = vsel %vm1501, %v1491, 0
      %1550 = vmatprep.subr.mxu0 0.0
      %v1551 = vand.u32 %v1492, 4294901760
      %1552 = vmatpush1.msra.mxu0 %v1551
      %1553 = vmatprep.subr.mxu0 0.0
      %v1554 = vand.u32 %v1493, 4294901760
      %1555 = vmatpush1.msra.mxu0 %v1554
      %1556 = vmatprep.subr.mxu0 0.0
      %1557 = vmatpush1.msra.mxu0 0.0
      %1558 = vmatprep.subr.mxu0 0.0
      %1559 = vmatpush1.msra.mxu0 0.0
      %1560 = vmatprep.subr.mxu0 0.0
      %1561 = vmatpush1.msra.mxu0 0.0
      %1562 = vmatprep.subr.mxu0 0.0
      %1563 = vmatpush1.msra.mxu0 0.0
      %1564 = vmatprep.subr.mxu0 0.0
      %1565 = vmatpush1.msra.mxu0 0.0
      %1566 = vmatprep.subr.mxu0 0.0
      %1567 = vmatpush1.msra.mxu0 0.0
      %1568 = vmatprep.subr.mxu0 0.0
      %1569 = vmatpush1.msra.mxu0 0.0
      %1570 = vmatprep.subr.mxu0 0.0
      %1571 = vmatpush1.msra.mxu0 0.0
      %1572 = vmatprep.subr.mxu0 0.0
      %1573 = vmatpush1.msra.mxu0 0.0
      %1574 = vmatprep.subr.mxu0 0.0
      %1575 = vmatpush1.msra.mxu0 0.0
      %1576 = vmatprep.subr.mxu0 0.0
      %1577 = vmatpush1.msra.mxu0 0.0
      %1578 = vmatprep.subr.mxu0 0.0
      %1579 = vmatpush1.msra.mxu0 0.0
      %1580 = vmatprep.subr.mxu0 0.0
      %1581 = vmatpush1.msra.mxu0 0.0
      %1582 = vmatprep.subr.mxu0 0.0
      %1583 = vmatpush1.msra.mxu0 0.0
      %1584 = vmatprep.subr.mxu0 0.0
      %1585 = vmatpush1.msra.mxu0 0.0
      %1586 = vmatprep.subr.mxu0 0.0
      %1587 = vmatpush1.msra.mxu0 0.0
      %1588 = vmatprep.subr.mxu0 0.0
      %1589 = vmatpush1.msra.mxu0 0.0
      %1590 = vmatprep.subr.mxu0 0.0
      %1591 = vmatpush1.msra.mxu0 0.0
      %1592 = vmatprep.subr.mxu0 0.0
      %1593 = vmatpush1.msra.mxu0 0.0
      %1594 = vmatprep.subr.mxu0 0.0
      %1595 = vmatpush1.msra.mxu0 0.0
      %1596 = vmatprep.subr.mxu0 0.0
      %1597 = vmatpush1.msra.mxu0 0.0
      %1598 = vmatprep.subr.mxu0 0.0
      %1599 = vmatpush1.msra.mxu0 0.0
      %1600 = vmatprep.subr.mxu0 0.0
      %1601 = vmatpush1.msra.mxu0 0.0
      %1602 = vmatprep.subr.mxu0 0.0
      %1603 = vmatpush1.msra.mxu0 0.0
      %1604 = vmatprep.subr.mxu0 0.0
      %1605 = vmatpush1.msra.mxu0 0.0
      %1606 = vmatprep.subr.mxu0 0.0
      %1607 = vmatpush1.msra.mxu0 0.0
      %1608 = vmatprep.subr.mxu0 0.0
      %1609 = vmatpush1.msra.mxu0 0.0
      %1610 = vmatprep.subr.mxu0 0.0
      %1611 = vmatpush1.msra.mxu0 0.0
      %1612 = vmatprep.subr.mxu0 0.0
      %1613 = vmatpush1.msra.mxu0 0.0
      %1614 = vmatprep.subr.mxu0 0.0
      %1615 = vmatpush1.msra.mxu0 0.0
      %1616 = vmatprep.mubr.f32.mxu0 0.0
      %v1617 = vand.u32 %v1503, 4294901760
      %v1618 = vsub.f32 %v1503, %v1617
      %v1619 = vand.u32 %v1618, 4294901760
      %v1620 = vsub.f32 %v1618, %v1619
      %v1621 = vand.u32 %v1620, 4294901760
      %1622 = vmatmul.mubr.f32.gmra.mrb[0].mxu0 %v1621
      %v1623 = vpop.f32.mrb[0].mxu0
      %v1624 = vadd.f32 %v1499, %v1623
      %v1625 = vpop.f32.mrb[0].mxu0
      %1626 = vmatprep.mubr.f32.mxu0 0.0
      %v1627 = vand.u32 %v1506, 4294901760
      %v1628 = vsub.f32 %v1506, %v1627
      %v1629 = vand.u32 %v1628, 4294901760
      %v1630 = vsub.f32 %v1628, %v1629
      %v1631 = vand.u32 %v1630, 4294901760
      %1632 = vmatmul.mubr.f32.gmra.mrb[0].mxu0 %v1631
      %v1633 = vpop.f32.mrb[0].mxu0
      %v1634 = vadd.f32 %v1499, %v1633
      %v1635 = vpop.f32.mrb[0].mxu0
      %1636 = vmatprep.mubr.f32.mxu0 0.0
      %v1637 = vand.u32 %v1509, 4294901760
      %v1638 = vsub.f32 %v1509, %v1637
      %v1639 = vand.u32 %v1638, 4294901760
      %v1640 = vsub.f32 %v1638, %v1639
      %v1641 = vand.u32 %v1640, 4294901760
      %1642 = vmatmul.mubr.f32.gmra.mrb[0].mxu0 %v1641
      %v1643 = vpop.f32.mrb[0].mxu0
      %v1644 = vadd.f32 %v1499, %v1643
      %v1645 = vpop.f32.mrb[0].mxu0
      %1646 = vmatprep.mubr.f32.mxu0 0.0
      %v1647 = vand.u32 %v1512, 4294901760
      %v1648 = vsub.f32 %v1512, %v1647
      %v1649 = vand.u32 %v1648, 4294901760
      %v1650 = vsub.f32 %v1648, %v1649
      %v1651 = vand.u32 %v1650, 4294901760
      %1652 = vmatmul.mubr.f32.gmra.mrb[0].mxu0 %v1651
      %v1653 = vpop.f32.mrb[0].mxu0
      %v1654 = vadd.f32 %v1499, %v1653
      %v1655 = vpop.f32.mrb[0].mxu0
      %1656 = vmatprep.mubr.f32.mxu0 0.0
      %v1657 = vand.u32 %v1515, 4294901760
      %v1658 = vsub.f32 %v1515, %v1657
      %v1659 = vand.u32 %v1658, 4294901760
      %v1660 = vsub.f32 %v1658, %v1659
      %v1661 = vand.u32 %v1660, 4294901760
      %1662 = vmatmul.mubr.f32.gmra.mrb[0].mxu0 %v1661
      %v1663 = vpop.f32.mrb[0].mxu0
      %v1664 = vadd.f32 %v1499, %v1663
      %v1665 = vpop.f32.mrb[0].mxu0
      %1666 = vmatprep.mubr.f32.mxu0 0.0
      %v1667 = vand.u32 %v1518, 4294901760
      %v1668 = vsub.f32 %v1518, %v1667
      %v1669 = vand.u32 %v1668, 4294901760
      %v1670 = vsub.f32 %v1668, %v1669
      %v1671 = vand.u32 %v1670, 4294901760
      %1672 = vmatmul.mubr.f32.gmra.mrb[0].mxu0 %v1671
      %v1673 = vpop.f32.mrb[0].mxu0
      %v1674 = vadd.f32 %v1499, %v1673
      %v1675 = vpop.f32.mrb[0].mxu0
      %1676 = vmatprep.mubr.f32.mxu0 0.0
      %v1677 = vand.u32 %v1521, 4294901760
      %v1678 = vsub.f32 %v1521, %v1677
      %v1679 = vand.u32 %v1678, 4294901760
      %v1680 = vsub.f32 %v1678, %v1679
      %v1681 = vand.u32 %v1680, 4294901760
      %1682 = vmatmul.mubr.f32.gmra.mrb[0].mxu0 %v1681
      %v1683 = vpop.f32.mrb[0].mxu0
      %v1684 = vadd.f32 %v1499, %v1683
      %v1685 = vpop.f32.mrb[0].mxu0
      %1686 = vmatprep.mubr.f32.mxu0 0.0
      %v1687 = vand.u32 %v1524, 4294901760
      %v1688 = vsub.f32 %v1524, %v1687
      %v1689 = vand.u32 %v1688, 4294901760
      %v1690 = vsub.f32 %v1688, %v1689
      %v1691 = vand.u32 %v1690, 4294901760
      %1692 = vmatmul.mubr.f32.gmra.mrb[0].mxu0 %v1691
      %v1693 = vpop.f32.mrb[0].mxu0
      %v1694 = vadd.f32 %v1499, %v1693
      %v1695 = vpop.f32.mrb[0].mxu0
      %1696 = vmatprep.mubr.f32.mxu0 0.0
      %v1697 = vand.u32 %v1527, 4294901760
      %v1698 = vsub.f32 %v1527, %v1697
      %v1699 = vand.u32 %v1698, 4294901760
      %v1700 = vsub.f32 %v1698, %v1699
      %v1701 = vand.u32 %v1700, 4294901760
      %1702 = vmatmul.mubr.f32.gmra.mrb[0].mxu0 %v1701
      %v1703 = vpop.f32.mrb[0].mxu0
      %v1704 = vadd.f32 %v1499, %v1703
      %v1705 = vpop.f32.mrb[0].mxu0
      %1706 = vmatprep.mubr.f32.mxu0 0.0
      %v1707 = vand.u32 %v1530, 4294901760
      %v1708 = vsub.f32 %v1530, %v1707
      %v1709 = vand.u32 %v1708, 4294901760
      %v1710 = vsub.f32 %v1708, %v1709
      %v1711 = vand.u32 %v1710, 4294901760
      %1712 = vmatmul.mubr.f32.gmra.mrb[0].mxu0 %v1711
      %v1713 = vpop.f32.mrb[0].mxu0
      %v1714 = vadd.f32 %v1499, %v1713
      %v1715 = vpop.f32.mrb[0].mxu0
      %1716 = vmatprep.mubr.f32.mxu0 0.0
      %v1717 = vand.u32 %v1533, 4294901760
      %v1718 = vsub.f32 %v1533, %v1717
      %v1719 = vand.u32 %v1718, 4294901760
      %v1720 = vsub.f32 %v1718, %v1719
      %v1721 = vand.u32 %v1720, 4294901760
      %1722 = vmatmul.mubr.f32.gmra.mrb[0].mxu0 %v1721
      %v1723 = vpop.f32.mrb[0].mxu0
      %v1724 = vadd.f32 %v1499, %v1723
      %v1725 = vpop.f32.mrb[0].mxu0
      %1726 = vmatprep.mubr.f32.mxu0 0.0
      %v1727 = vand.u32 %v1536, 4294901760
      %v1728 = vsub.f32 %v1536, %v1727
      %v1729 = vand.u32 %v1728, 4294901760
      %v1730 = vsub.f32 %v1728, %v1729
      %v1731 = vand.u32 %v1730, 4294901760
      %1732 = vmatmul.mubr.f32.gmra.mrb[0].mxu0 %v1731
      %v1733 = vpop.f32.mrb[0].mxu0
      %v1734 = vadd.f32 %v1499, %v1733
      %v1735 = vpop.f32.mrb[0].mxu0
      %1736 = vmatprep.mubr.f32.mxu0 0.0
      %v1737 = vand.u32 %v1539, 4294901760
      %v1738 = vsub.f32 %v1539, %v1737
      %v1739 = vand.u32 %v1738, 4294901760
      %v1740 = vsub.f32 %v1738, %v1739
      %v1741 = vand.u32 %v1740, 4294901760
      %1742 = vmatmul.mubr.f32.gmra.mrb[0].mxu0 %v1741
      %v1743 = vpop.f32.mrb[0].mxu0
      %v1744 = vadd.f32 %v1499, %v1743
      %v1745 = vpop.f32.mrb[0].mxu0
      %1746 = vmatprep.mubr.f32.mxu0 0.0
      %v1747 = vand.u32 %v1542, 4294901760
      %v1748 = vsub.f32 %v1542, %v1747
      %v1749 = vand.u32 %v1748, 4294901760
      %v1750 = vsub.f32 %v1748, %v1749
      %v1751 = vand.u32 %v1750, 4294901760
      %1752 = vmatmul.mubr.f32.gmra.mrb[0].mxu0 %v1751
      %v1753 = vpop.f32.mrb[0].mxu0
      %v1754 = vadd.f32 %v1499, %v1753
      %v1755 = vpop.f32.mrb[0].mxu0
      %1756 = vmatprep.mubr.f32.mxu0 0.0
      %v1757 = vand.u32 %v1545, 4294901760
      %v1758 = vsub.f32 %v1545, %v1757
      %v1759 = vand.u32 %v1758, 4294901760
      %v1760 = vsub.f32 %v1758, %v1759
      %v1761 = vand.u32 %v1760, 4294901760
      %1762 = vmatmul.mubr.f32.gmra.mrb[0].mxu0 %v1761
      %v1763 = vpop.f32.mrb[0].mxu0
      %v1764 = vadd.f32 %v1499, %v1763
      %v1765 = vpop.f32.mrb[0].mxu0
      %1766 = vmatprep.mubr.f32.mxu0 0.0
      %v1767 = vand.u32 %v1548, 4294901760
      %v1768 = vsub.f32 %v1548, %v1767
      %v1769 = vand.u32 %v1768, 4294901760
      %v1770 = vsub.f32 %v1768, %v1769
      %v1771 = vand.u32 %v1770, 4294901760
      %1772 = vmatmul.mubr.f32.gmra.mrb[0].mxu0 %v1771
      %v1773 = vpop.f32.mrb[0].mxu0
      %v1774 = vadd.f32 %v1499, %v1773
      %v1775 = vpop.f32.mrb[0].mxu0
      %1776 = vdwg.mxu0
      %1777 = vmatprep.subr.mxu0 0.0
      %v1778 = vand.u32 %v1492, 4294901760
      %v1779 = vsub.f32 %v1492, %v1778
      %v1780 = vand.u32 %v1779, 4294901760
      %v1781 = vsub.f32 %v1779, %v1780
      %v1782 = vand.u32 %v1781, 4294901760
      %1783 = vmatpush1.msra.mxu0 %v1782
      %1784 = vmatprep.subr.mxu0 0.0
      %v1785 = vand.u32 %v1493, 4294901760
      %v1786 = vsub.f32 %v1493, %v1785
      %v1787 = vand.u32 %v1786, 4294901760
      %v1788 = vsub.f32 %v1786, %v1787
      %v1789 = vand.u32 %v1788, 4294901760
      %1790 = vmatpush1.msra.mxu0 %v1789
      %1791 = vmatprep.subr.mxu0 0.0
      %1792 = vmatpush1.msra.mxu0 0.0
      %1793 = vmatprep.subr.mxu0 0.0
      %1794 = vmatpush1.msra.mxu0 0.0
      %1795 = vmatprep.subr.mxu0 0.0
      %1796 = vmatpush1.msra.mxu0 0.0
      %1797 = vmatprep.subr.mxu0 0.0
      %1798 = vmatpush1.msra.mxu0 0.0
      %1799 = vmatprep.subr.mxu0 0.0
      %1800 = vmatpush1.msra.mxu0 0.0
      %1801 = vmatprep.subr.mxu0 0.0
      %1802 = vmatpush1.msra.mxu0 0.0
      %1803 = vmatprep.subr.mxu0 0.0
      %1804 = vmatpush1.msra.mxu0 0.0
      %1805 = vmatprep.subr.mxu0 0.0
      %1806 = vmatpush1.msra.mxu0 0.0
      %1807 = vmatprep.subr.mxu0 0.0
      %1808 = vmatpush1.msra.mxu0 0.0
      %1809 = vmatprep.subr.mxu0 0.0
      %1810 = vmatpush1.msra.mxu0 0.0
      %1811 = vmatprep.subr.mxu0 0.0
      %1812 = vmatpush1.msra.mxu0 0.0
      %1813 = vmatprep.subr.mxu0 0.0
      %1814 = vmatpush1.msra.mxu0 0.0
      %1815 = vmatprep.subr.mxu0 0.0
      %1816 = vmatpush1.msra.mxu0 0.0
      %1817 = vmatprep.subr.mxu0 0.0
      %1818 = vmatpush1.msra.mxu0 0.0
      %1819 = vmatprep.subr.mxu0 0.0
      %1820 = vmatpush1.msra.mxu0 0.0
      %1821 = vmatprep.subr.mxu0 0.0
      %1822 = vmatpush1.msra.mxu0 0.0
      %1823 = vmatprep.subr.mxu0 0.0
      %1824 = vmatpush1.msra.mxu0 0.0
      %1825 = vmatprep.subr.mxu0 0.0
      %1826 = vmatpush1.msra.mxu0 0.0
      %1827 = vmatprep.subr.mxu0 0.0
      %1828 = vmatpush1.msra.mxu0 0.0
      %1829 = vmatprep.subr.mxu0 0.0
      %1830 = vmatpush1.msra.mxu0 0.0
      %1831 = vmatprep.subr.mxu0 0.0
      %1832 = vmatpush1.msra.mxu0 0.0
      %1833 = vmatprep.subr.mxu0 0.0
      %1834 = vmatpush1.msra.mxu0 0.0
      %1835 = vmatprep.subr.mxu0 0.0
      %1836 = vmatpush1.msra.mxu0 0.0
      %1837 = vmatprep.subr.mxu0 0.0
      %1838 = vmatpush1.msra.mxu0 0.0
      %1839 = vmatprep.subr.mxu0 0.0
      %1840 = vmatpush1.msra.mxu0 0.0
      %1841 = vmatprep.subr.mxu0 0.0
      %1842 = vmatpush1.msra.mxu0 0.0
      %1843 = vmatprep.subr.mxu0 0.0
      %1844 = vmatpush1.msra.mxu0 0.0
      %1845 = vmatprep.subr.mxu0 0.0
      %1846 = vmatpush1.msra.mxu0 0.0
      %1847 = vmatprep.subr.mxu0 0.0
      %1848 = vmatpush1.msra.mxu0 0.0
      %1849 = vmatprep.subr.mxu0 0.0
      %1850 = vmatpush1.msra.mxu0 0.0
      %1851 = vmatprep.mubr.f32.mxu0 0.0
      %v1852 = vand.u32 %v1503, 4294901760
      %1853 = vmatmul.mubr.f32.gmra.mrb[0].mxu0 %v1852
      %v1854 = vpop.f32.mrb[0].mxu0
      %v1855 = vadd.f32 %v1624, %v1854
      %v1856 = vpop.f32.mrb[0].mxu0
      %1857 = vmatprep.mubr.f32.mxu0 0.0
      %v1858 = vand.u32 %v1506, 4294901760
      %1859 = vmatmul.mubr.f32.gmra.mrb[0].mxu0 %v1858
      %v1860 = vpop.f32.mrb[0].mxu0
      %v1861 = vadd.f32 %v1634, %v1860
      %v1862 = vpop.f32.mrb[0].mxu0
      %1863 = vmatprep.mubr.f32.mxu0 0.0
      %v1864 = vand.u32 %v1509, 4294901760
      %1865 = vmatmul.mubr.f32.gmra.mrb[0].mxu0 %v1864
      %v1866 = vpop.f32.mrb[0].mxu0
      %v1867 = vadd.f32 %v1644, %v1866
      %v1868 = vpop.f32.mrb[0].mxu0
      %1869 = vmatprep.mubr.f32.mxu0 0.0
      %v1870 = vand.u32 %v1512, 4294901760
      %1871 = vmatmul.mubr.f32.gmra.mrb[0].mxu0 %v1870
      %v1872 = vpop.f32.mrb[0].mxu0
      %v1873 = vadd.f32 %v1654, %v1872
      %v1874 = vpop.f32.mrb[0].mxu0
      %1875 = vmatprep.mubr.f32.mxu0 0.0
      %v1876 = vand.u32 %v1515, 4294901760
      %1877 = vmatmul.mubr.f32.gmra.mrb[0].mxu0 %v1876
      %v1878 = vpop.f32.mrb[0].mxu0
      %v1879 = vadd.f32 %v1664, %v1878
      %v1880 = vpop.f32.mrb[0].mxu0
      %1881 = vmatprep.mubr.f32.mxu0 0.0
      %v1882 = vand.u32 %v1518, 4294901760
      %1883 = vmatmul.mubr.f32.gmra.mrb[0].mxu0 %v1882
      %v1884 = vpop.f32.mrb[0].mxu0
      %v1885 = vadd.f32 %v1674, %v1884
      %v1886 = vpop.f32.mrb[0].mxu0
      %1887 = vmatprep.mubr.f32.mxu0 0.0
      %v1888 = vand.u32 %v1521, 4294901760
      %1889 = vmatmul.mubr.f32.gmra.mrb[0].mxu0 %v1888
      %v1890 = vpop.f32.mrb[0].mxu0
      %v1891 = vadd.f32 %v1684, %v1890
      %v1892 = vpop.f32.mrb[0].mxu0
      %1893 = vmatprep.mubr.f32.mxu0 0.0
      %v1894 = vand.u32 %v1524, 4294901760
      %1895 = vmatmul.mubr.f32.gmra.mrb[0].mxu0 %v1894
      %v1896 = vpop.f32.mrb[0].mxu0
      %v1897 = vadd.f32 %v1694, %v1896
      %v1898 = vpop.f32.mrb[0].mxu0
      %1899 = vmatprep.mubr.f32.mxu0 0.0
      %v1900 = vand.u32 %v1527, 4294901760
      %1901 = vmatmul.mubr.f32.gmra.mrb[0].mxu0 %v1900
      %v1902 = vpop.f32.mrb[0].mxu0
      %v1903 = vadd.f32 %v1704, %v1902
      %v1904 = vpop.f32.mrb[0].mxu0
      %1905 = vmatprep.mubr.f32.mxu0 0.0
      %v1906 = vand.u32 %v1530, 4294901760
      %1907 = vmatmul.mubr.f32.gmra.mrb[0].mxu0 %v1906
      %v1908 = vpop.f32.mrb[0].mxu0
      %v1909 = vadd.f32 %v1714, %v1908
      %v1910 = vpop.f32.mrb[0].mxu0
      %1911 = vmatprep.mubr.f32.mxu0 0.0
      %v1912 = vand.u32 %v1533, 4294901760
      %1913 = vmatmul.mubr.f32.gmra.mrb[0].mxu0 %v1912
      %v1914 = vpop.f32.mrb[0].mxu0
      %v1915 = vadd.f32 %v1724, %v1914
      %v1916 = vpop.f32.mrb[0].mxu0
      %1917 = vmatprep.mubr.f32.mxu0 0.0
      %v1918 = vand.u32 %v1536, 4294901760
      %1919 = vmatmul.mubr.f32.gmra.mrb[0].mxu0 %v1918
      %v1920 = vpop.f32.mrb[0].mxu0
      %v1921 = vadd.f32 %v1734, %v1920
      %v1922 = vpop.f32.mrb[0].mxu0
      %1923 = vmatprep.mubr.f32.mxu0 0.0
      %v1924 = vand.u32 %v1539, 4294901760
      %1925 = vmatmul.mubr.f32.gmra.mrb[0].mxu0 %v1924
      %v1926 = vpop.f32.mrb[0].mxu0
      %v1927 = vadd.f32 %v1744, %v1926
      %v1928 = vpop.f32.mrb[0].mxu0
      %1929 = vmatprep.mubr.f32.mxu0 0.0
      %v1930 = vand.u32 %v1542, 4294901760
      %1931 = vmatmul.mubr.f32.gmra.mrb[0].mxu0 %v1930
      %v1932 = vpop.f32.mrb[0].mxu0
      %v1933 = vadd.f32 %v1754, %v1932
      %v1934 = vpop.f32.mrb[0].mxu0
      %1935 = vmatprep.mubr.f32.mxu0 0.0
      %v1936 = vand.u32 %v1545, 4294901760
      %1937 = vmatmul.mubr.f32.gmra.mrb[0].mxu0 %v1936
      %v1938 = vpop.f32.mrb[0].mxu0
      %v1939 = vadd.f32 %v1764, %v1938
      %v1940 = vpop.f32.mrb[0].mxu0
      %1941 = vmatprep.mubr.f32.mxu0 0.0
      %v1942 = vand.u32 %v1548, 4294901760
      %1943 = vmatmul.mubr.f32.gmra.mrb[0].mxu0 %v1942
      %v1944 = vpop.f32.mrb[0].mxu0
      %v1945 = vadd.f32 %v1774, %v1944
      %v1946 = vpop.f32.mrb[0].mxu0
      %1947 = vdwg.mxu0
      %1948 = vmatprep.subr.mxu0 0.0
      %v1949 = vand.u32 %v1492, 4294901760
      %v1950 = vsub.f32 %v1492, %v1949
      %1951 = vmatpush1.msra.mxu0 %v1950
      %1952 = vmatprep.subr.mxu0 0.0
      %v1953 = vand.u32 %v1493, 4294901760
      %v1954 = vsub.f32 %v1493, %v1953
      %1955 = vmatpush1.msra.mxu0 %v1954
      %1956 = vmatprep.subr.mxu0 0.0
      %1957 = vmatpush1.msra.mxu0 0.0
      %1958 = vmatprep.subr.mxu0 0.0
      %1959 = vmatpush1.msra.mxu0 0.0
      %1960 = vmatprep.subr.mxu0 0.0
      %1961 = vmatpush1.msra.mxu0 0.0
      %1962 = vmatprep.subr.mxu0 0.0
      %1963 = vmatpush1.msra.mxu0 0.0
      %1964 = vmatprep.subr.mxu0 0.0
      %1965 = vmatpush1.msra.mxu0 0.0
      %1966 = vmatprep.subr.mxu0 0.0
      %1967 = vmatpush1.msra.mxu0 0.0
      %1968 = vmatprep.subr.mxu0 0.0
      %1969 = vmatpush1.msra.mxu0 0.0
      %1970 = vmatprep.subr.mxu0 0.0
      %1971 = vmatpush1.msra.mxu0 0.0
      %1972 = vmatprep.subr.mxu0 0.0
      %1973 = vmatpush1.msra.mxu0 0.0
      %1974 = vmatprep.subr.mxu0 0.0
      %1975 = vmatpush1.msra.mxu0 0.0
      %1976 = vmatprep.subr.mxu0 0.0
      %1977 = vmatpush1.msra.mxu0 0.0
      %1978 = vmatprep.subr.mxu0 0.0
      %1979 = vmatpush1.msra.mxu0 0.0
      %1980 = vmatprep.subr.mxu0 0.0
      %1981 = vmatpush1.msra.mxu0 0.0
      %1982 = vmatprep.subr.mxu0 0.0
      %1983 = vmatpush1.msra.mxu0 0.0
      %1984 = vmatprep.subr.mxu0 0.0
      %1985 = vmatpush1.msra.mxu0 0.0
      %1986 = vmatprep.subr.mxu0 0.0
      %1987 = vmatpush1.msra.mxu0 0.0
      %1988 = vmatprep.subr.mxu0 0.0
      %1989 = vmatpush1.msra.mxu0 0.0
      %1990 = vmatprep.subr.mxu0 0.0
      %1991 = vmatpush1.msra.mxu0 0.0
      %1992 = vmatprep.subr.mxu0 0.0
      %1993 = vmatpush1.msra.mxu0 0.0
      %1994 = vmatprep.subr.mxu0 0.0
      %1995 = vmatpush1.msra.mxu0 0.0
      %1996 = vmatprep.subr.mxu0 0.0
      %1997 = vmatpush1.msra.mxu0 0.0
      %1998 = vmatprep.subr.mxu0 0.0
      %1999 = vmatpush1.msra.mxu0 0.0
      %2000 = vmatprep.subr.mxu0 0.0
      %2001 = vmatpush1.msra.mxu0 0.0
      %2002 = vmatprep.subr.mxu0 0.0
      %2003 = vmatpush1.msra.mxu0 0.0
      %2004 = vmatprep.subr.mxu0 0.0
      %2005 = vmatpush1.msra.mxu0 0.0
      %2006 = vmatprep.subr.mxu0 0.0
      %2007 = vmatpush1.msra.mxu0 0.0
      %2008 = vmatprep.subr.mxu0 0.0
      %2009 = vmatpush1.msra.mxu0 0.0
      %2010 = vmatprep.subr.mxu0 0.0
      %2011 = vmatpush1.msra.mxu0 0.0
      %2012 = vmatprep.subr.mxu0 0.0
      %2013 = vmatpush1.msra.mxu0 0.0
      %2014 = vmatprep.subr.mxu0 0.0
      %2015 = vmatpush1.msra.mxu0 0.0
      %2016 = vmatprep.mubr.f32.mxu0 0.0
      %v2017 = vand.u32 %v1503, 4294901760
      %v2018 = vsub.f32 %v1503, %v2017
      %2019 = vmatmul.mubr.f32.gmra.mrb[0].mxu0 %v2018
      %v2020 = vpop.f32.mrb[0].mxu0
      %v2021 = vadd.f32 %v1855, %v2020
      %v2022 = vpop.f32.mrb[0].mxu0
      %2023 = vmatprep.mubr.f32.mxu0 0.0
      %v2024 = vand.u32 %v1506, 4294901760
      %v2025 = vsub.f32 %v1506, %v2024
      %2026 = vmatmul.mubr.f32.gmra.mrb[0].mxu0 %v2025
      %v2027 = vpop.f32.mrb[0].mxu0
      %v2028 = vadd.f32 %v1861, %v2027
      %v2029 = vpop.f32.mrb[0].mxu0
      %2030 = vmatprep.mubr.f32.mxu0 0.0
      %v2031 = vand.u32 %v1509, 4294901760
      %v2032 = vsub.f32 %v1509, %v2031
      %2033 = vmatmul.mubr.f32.gmra.mrb[0].mxu0 %v2032
      %v2034 = vpop.f32.mrb[0].mxu0
      %v2035 = vadd.f32 %v1867, %v2034
      %v2036 = vpop.f32.mrb[0].mxu0
      %2037 = vmatprep.mubr.f32.mxu0 0.0
      %v2038 = vand.u32 %v1512, 4294901760
      %v2039 = vsub.f32 %v1512, %v2038
      %2040 = vmatmul.mubr.f32.gmra.mrb[0].mxu0 %v2039
      %v2041 = vpop.f32.mrb[0].mxu0
      %v2042 = vadd.f32 %v1873, %v2041
      %v2043 = vpop.f32.mrb[0].mxu0
      %2044 = vmatprep.mubr.f32.mxu0 0.0
      %v2045 = vand.u32 %v1515, 4294901760
      %v2046 = vsub.f32 %v1515, %v2045
      %2047 = vmatmul.mubr.f32.gmra.mrb[0].mxu0 %v2046
      %v2048 = vpop.f32.mrb[0].mxu0
      %v2049 = vadd.f32 %v1879, %v2048
      %v2050 = vpop.f32.mrb[0].mxu0
      %2051 = vmatprep.mubr.f32.mxu0 0.0
      %v2052 = vand.u32 %v1518, 4294901760
      %v2053 = vsub.f32 %v1518, %v2052
      %2054 = vmatmul.mubr.f32.gmra.mrb[0].mxu0 %v2053
      %v2055 = vpop.f32.mrb[0].mxu0
      %v2056 = vadd.f32 %v1885, %v2055
      %v2057 = vpop.f32.mrb[0].mxu0
      %2058 = vmatprep.mubr.f32.mxu0 0.0
      %v2059 = vand.u32 %v1521, 4294901760
      %v2060 = vsub.f32 %v1521, %v2059
      %2061 = vmatmul.mubr.f32.gmra.mrb[0].mxu0 %v2060
      %v2062 = vpop.f32.mrb[0].mxu0
      %v2063 = vadd.f32 %v1891, %v2062
      %v2064 = vpop.f32.mrb[0].mxu0
      %2065 = vmatprep.mubr.f32.mxu0 0.0
      %v2066 = vand.u32 %v1524, 4294901760
      %v2067 = vsub.f32 %v1524, %v2066
      %2068 = vmatmul.mubr.f32.gmra.mrb[0].mxu0 %v2067
      %v2069 = vpop.f32.mrb[0].mxu0
      %v2070 = vadd.f32 %v1897, %v2069
      %v2071 = vpop.f32.mrb[0].mxu0
      %2072 = vmatprep.mubr.f32.mxu0 0.0
      %v2073 = vand.u32 %v1527, 4294901760
      %v2074 = vsub.f32 %v1527, %v2073
      %2075 = vmatmul.mubr.f32.gmra.mrb[0].mxu0 %v2074
      %v2076 = vpop.f32.mrb[0].mxu0
      %v2077 = vadd.f32 %v1903, %v2076
      %v2078 = vpop.f32.mrb[0].mxu0
      %2079 = vmatprep.mubr.f32.mxu0 0.0
      %v2080 = vand.u32 %v1530, 4294901760
      %v2081 = vsub.f32 %v1530, %v2080
      %2082 = vmatmul.mubr.f32.gmra.mrb[0].mxu0 %v2081
      %v2083 = vpop.f32.mrb[0].mxu0
      %v2084 = vadd.f32 %v1909, %v2083
      %v2085 = vpop.f32.mrb[0].mxu0
      %2086 = vmatprep.mubr.f32.mxu0 0.0
      %v2087 = vand.u32 %v1533, 4294901760
      %v2088 = vsub.f32 %v1533, %v2087
      %2089 = vmatmul.mubr.f32.gmra.mrb[0].mxu0 %v2088
      %v2090 = vpop.f32.mrb[0].mxu0
      %v2091 = vadd.f32 %v1915, %v2090
      %v2092 = vpop.f32.mrb[0].mxu0
      %2093 = vmatprep.mubr.f32.mxu0 0.0
      %v2094 = vand.u32 %v1536, 4294901760
      %v2095 = vsub.f32 %v1536, %v2094
      %2096 = vmatmul.mubr.f32.gmra.mrb[0].mxu0 %v2095
      %v2097 = vpop.f32.mrb[0].mxu0
      %v2098 = vadd.f32 %v1921, %v2097
      %v2099 = vpop.f32.mrb[0].mxu0
      %2100 = vmatprep.mubr.f32.mxu0 0.0
      %v2101 = vand.u32 %v1539, 4294901760
      %v2102 = vsub.f32 %v1539, %v2101
      %2103 = vmatmul.mubr.f32.gmra.mrb[0].mxu0 %v2102
      %v2104 = vpop.f32.mrb[0].mxu0
      %v2105 = vadd.f32 %v1927, %v2104
      %v2106 = vpop.f32.mrb[0].mxu0
      %2107 = vmatprep.mubr.f32.mxu0 0.0
      %v2108 = vand.u32 %v1542, 4294901760
      %v2109 = vsub.f32 %v1542, %v2108
      %2110 = vmatmul.mubr.f32.gmra.mrb[0].mxu0 %v2109
      %v2111 = vpop.f32.mrb[0].mxu0
      %v2112 = vadd.f32 %v1933, %v2111
      %v2113 = vpop.f32.mrb[0].mxu0
      %2114 = vmatprep.mubr.f32.mxu0 0.0
      %v2115 = vand.u32 %v1545, 4294901760
      %v2116 = vsub.f32 %v1545, %v2115
      %2117 = vmatmul.mubr.f32.gmra.mrb[0].mxu0 %v2116
      %v2118 = vpop.f32.mrb[0].mxu0
      %v2119 = vadd.f32 %v1939, %v2118
      %v2120 = vpop.f32.mrb[0].mxu0
      %2121 = vmatprep.mubr.f32.mxu0 0.0
      %v2122 = vand.u32 %v1548, 4294901760
      %v2123 = vsub.f32 %v1548, %v2122
      %2124 = vmatmul.mubr.f32.gmra.mrb[0].mxu0 %v2123
      %v2125 = vpop.f32.mrb[0].mxu0
      %v2126 = vadd.f32 %v1945, %v2125
      %v2127 = vpop.f32.mrb[0].mxu0
      %2128 = vdwg.mxu0
      %2129 = vmatprep.subr.mxu0 0.0
      %v2130 = vand.u32 %v1492, 4294901760
      %2131 = vmatpush1.msra.mxu0 %v2130
      %2132 = vmatprep.subr.mxu0 0.0
      %v2133 = vand.u32 %v1493, 4294901760
      %2134 = vmatpush1.msra.mxu0 %v2133
      %2135 = vmatprep.subr.mxu0 0.0
      %2136 = vmatpush1.msra.mxu0 0.0
      %2137 = vmatprep.subr.mxu0 0.0
      %2138 = vmatpush1.msra.mxu0 0.0
      %2139 = vmatprep.subr.mxu0 0.0
      %2140 = vmatpush1.msra.mxu0 0.0
      %2141 = vmatprep.subr.mxu0 0.0
      %2142 = vmatpush1.msra.mxu0 0.0
      %2143 = vmatprep.subr.mxu0 0.0
      %2144 = vmatpush1.msra.mxu0 0.0
      %2145 = vmatprep.subr.mxu0 0.0
      %2146 = vmatpush1.msra.mxu0 0.0
      %2147 = vmatprep.subr.mxu0 0.0
      %2148 = vmatpush1.msra.mxu0 0.0
      %2149 = vmatprep.subr.mxu0 0.0
      %2150 = vmatpush1.msra.mxu0 0.0
      %2151 = vmatprep.subr.mxu0 0.0
      %2152 = vmatpush1.msra.mxu0 0.0
      %2153 = vmatprep.subr.mxu0 0.0
      %2154 = vmatpush1.msra.mxu0 0.0
      %2155 = vmatprep.subr.mxu0 0.0
      %2156 = vmatpush1.msra.mxu0 0.0
      %2157 = vmatprep.subr.mxu0 0.0
      %2158 = vmatpush1.msra.mxu0 0.0
      %2159 = vmatprep.subr.mxu0 0.0
      %2160 = vmatpush1.msra.mxu0 0.0
      %2161 = vmatprep.subr.mxu0 0.0
      %2162 = vmatpush1.msra.mxu0 0.0
      %2163 = vmatprep.subr.mxu0 0.0
      %2164 = vmatpush1.msra.mxu0 0.0
      %2165 = vmatprep.subr.mxu0 0.0
      %2166 = vmatpush1.msra.mxu0 0.0
      %2167 = vmatprep.subr.mxu0 0.0
      %2168 = vmatpush1.msra.mxu0 0.0
      %2169 = vmatprep.subr.mxu0 0.0
      %2170 = vmatpush1.msra.mxu0 0.0
      %2171 = vmatprep.subr.mxu0 0.0
      %2172 = vmatpush1.msra.mxu0 0.0
      %2173 = vmatprep.subr.mxu0 0.0
      %2174 = vmatpush1.msra.mxu0 0.0
      %2175 = vmatprep.subr.mxu0 0.0
      %2176 = vmatpush1.msra.mxu0 0.0
      %2177 = vmatprep.subr.mxu0 0.0
      %2178 = vmatpush1.msra.mxu0 0.0
      %2179 = vmatprep.subr.mxu0 0.0
      %2180 = vmatpush1.msra.mxu0 0.0
      %2181 = vmatprep.subr.mxu0 0.0
      %2182 = vmatpush1.msra.mxu0 0.0
      %2183 = vmatprep.subr.mxu0 0.0
      %2184 = vmatpush1.msra.mxu0 0.0
      %2185 = vmatprep.subr.mxu0 0.0
      %2186 = vmatpush1.msra.mxu0 0.0
      %2187 = vmatprep.subr.mxu0 0.0
      %2188 = vmatpush1.msra.mxu0 0.0
      %2189 = vmatprep.subr.mxu0 0.0
      %2190 = vmatpush1.msra.mxu0 0.0
      %2191 = vmatprep.subr.mxu0 0.0
      %2192 = vmatpush1.msra.mxu0 0.0
      %2193 = vmatprep.subr.mxu0 0.0
      %2194 = vmatpush1.msra.mxu0 0.0
      %2195 = vmatprep.mubr.f32.mxu0 0.0
      %v2196 = vand.u32 %v1503, 4294901760
      %v2197 = vsub.f32 %v1503, %v2196
      %v2198 = vand.u32 %v2197, 4294901760
      %2199 = vmatmul.mubr.f32.gmra.mrb[0].mxu0 %v2198
      %v2200 = vpop.f32.mrb[0].mxu0
      %v2201 = vadd.f32 %v2021, %v2200
      %v2202 = vpop.f32.mrb[0].mxu0
      %2203 = vmatprep.mubr.f32.mxu0 0.0
      %v2204 = vand.u32 %v1506, 4294901760
      %v2205 = vsub.f32 %v1506, %v2204
      %v2206 = vand.u32 %v2205, 4294901760
      %2207 = vmatmul.mubr.f32.gmra.mrb[0].mxu0 %v2206
      %v2208 = vpop.f32.mrb[0].mxu0
      %v2209 = vadd.f32 %v2028, %v2208
      %v2210 = vpop.f32.mrb[0].mxu0
      %2211 = vmatprep.mubr.f32.mxu0 0.0
      %v2212 = vand.u32 %v1509, 4294901760
      %v2213 = vsub.f32 %v1509, %v2212
      %v2214 = vand.u32 %v2213, 4294901760
      %2215 = vmatmul.mubr.f32.gmra.mrb[0].mxu0 %v2214
      %v2216 = vpop.f32.mrb[0].mxu0
      %v2217 = vadd.f32 %v2035, %v2216
      %v2218 = vpop.f32.mrb[0].mxu0
      %2219 = vmatprep.mubr.f32.mxu0 0.0
      %v2220 = vand.u32 %v1512, 4294901760
      %v2221 = vsub.f32 %v1512, %v2220
      %v2222 = vand.u32 %v2221, 4294901760
      %2223 = vmatmul.mubr.f32.gmra.mrb[0].mxu0 %v2222
      %v2224 = vpop.f32.mrb[0].mxu0
      %v2225 = vadd.f32 %v2042, %v2224
      %v2226 = vpop.f32.mrb[0].mxu0
      %2227 = vmatprep.mubr.f32.mxu0 0.0
      %v2228 = vand.u32 %v1515, 4294901760
      %v2229 = vsub.f32 %v1515, %v2228
      %v2230 = vand.u32 %v2229, 4294901760
      %2231 = vmatmul.mubr.f32.gmra.mrb[0].mxu0 %v2230
      %v2232 = vpop.f32.mrb[0].mxu0
      %v2233 = vadd.f32 %v2049, %v2232
      %v2234 = vpop.f32.mrb[0].mxu0
      %2235 = vmatprep.mubr.f32.mxu0 0.0
      %v2236 = vand.u32 %v1518, 4294901760
      %v2237 = vsub.f32 %v1518, %v2236
      %v2238 = vand.u32 %v2237, 4294901760
      %2239 = vmatmul.mubr.f32.gmra.mrb[0].mxu0 %v2238
      %v2240 = vpop.f32.mrb[0].mxu0
      %v2241 = vadd.f32 %v2056, %v2240
      %v2242 = vpop.f32.mrb[0].mxu0
      %2243 = vmatprep.mubr.f32.mxu0 0.0
      %v2244 = vand.u32 %v1521, 4294901760
      %v2245 = vsub.f32 %v1521, %v2244
      %v2246 = vand.u32 %v2245, 4294901760
      %2247 = vmatmul.mubr.f32.gmra.mrb[0].mxu0 %v2246
      %v2248 = vpop.f32.mrb[0].mxu0
      %v2249 = vadd.f32 %v2063, %v2248
      %v2250 = vpop.f32.mrb[0].mxu0
      %2251 = vmatprep.mubr.f32.mxu0 0.0
      %v2252 = vand.u32 %v1524, 4294901760
      %v2253 = vsub.f32 %v1524, %v2252
      %v2254 = vand.u32 %v2253, 4294901760
      %2255 = vmatmul.mubr.f32.gmra.mrb[0].mxu0 %v2254
      %v2256 = vpop.f32.mrb[0].mxu0
      %v2257 = vadd.f32 %v2070, %v2256
      %v2258 = vpop.f32.mrb[0].mxu0
      %2259 = vmatprep.mubr.f32.mxu0 0.0
      %v2260 = vand.u32 %v1527, 4294901760
      %v2261 = vsub.f32 %v1527, %v2260
      %v2262 = vand.u32 %v2261, 4294901760
      %2263 = vmatmul.mubr.f32.gmra.mrb[0].mxu0 %v2262
      %v2264 = vpop.f32.mrb[0].mxu0
      %v2265 = vadd.f32 %v2077, %v2264
      %v2266 = vpop.f32.mrb[0].mxu0
      %2267 = vmatprep.mubr.f32.mxu0 0.0
      %v2268 = vand.u32 %v1530, 4294901760
      %v2269 = vsub.f32 %v1530, %v2268
      %v2270 = vand.u32 %v2269, 4294901760
      %2271 = vmatmul.mubr.f32.gmra.mrb[0].mxu0 %v2270
      %v2272 = vpop.f32.mrb[0].mxu0
      %v2273 = vadd.f32 %v2084, %v2272
      %v2274 = vpop.f32.mrb[0].mxu0
      %2275 = vmatprep.mubr.f32.mxu0 0.0
      %v2276 = vand.u32 %v1533, 4294901760
      %v2277 = vsub.f32 %v1533, %v2276
      %v2278 = vand.u32 %v2277, 4294901760
      %2279 = vmatmul.mubr.f32.gmra.mrb[0].mxu0 %v2278
      %v2280 = vpop.f32.mrb[0].mxu0
      %v2281 = vadd.f32 %v2091, %v2280
      %v2282 = vpop.f32.mrb[0].mxu0
      %2283 = vmatprep.mubr.f32.mxu0 0.0
      %v2284 = vand.u32 %v1536, 4294901760
      %v2285 = vsub.f32 %v1536, %v2284
      %v2286 = vand.u32 %v2285, 4294901760
      %2287 = vmatmul.mubr.f32.gmra.mrb[0].mxu0 %v2286
      %v2288 = vpop.f32.mrb[0].mxu0
      %v2289 = vadd.f32 %v2098, %v2288
      %v2290 = vpop.f32.mrb[0].mxu0
      %2291 = vmatprep.mubr.f32.mxu0 0.0
      %v2292 = vand.u32 %v1539, 4294901760
      %v2293 = vsub.f32 %v1539, %v2292
      %v2294 = vand.u32 %v2293, 4294901760
      %2295 = vmatmul.mubr.f32.gmra.mrb[0].mxu0 %v2294
      %v2296 = vpop.f32.mrb[0].mxu0
      %v2297 = vadd.f32 %v2105, %v2296
      %v2298 = vpop.f32.mrb[0].mxu0
      %2299 = vmatprep.mubr.f32.mxu0 0.0
      %v2300 = vand.u32 %v1542, 4294901760
      %v2301 = vsub.f32 %v1542, %v2300
      %v2302 = vand.u32 %v2301, 4294901760
      %2303 = vmatmul.mubr.f32.gmra.mrb[0].mxu0 %v2302
      %v2304 = vpop.f32.mrb[0].mxu0
      %v2305 = vadd.f32 %v2112, %v2304
      %v2306 = vpop.f32.mrb[0].mxu0
      %2307 = vmatprep.mubr.f32.mxu0 0.0
      %v2308 = vand.u32 %v1545, 4294901760
      %v2309 = vsub.f32 %v1545, %v2308
      %v2310 = vand.u32 %v2309, 4294901760
      %2311 = vmatmul.mubr.f32.gmra.mrb[0].mxu0 %v2310
      %v2312 = vpop.f32.mrb[0].mxu0
      %v2313 = vadd.f32 %v2119, %v2312
      %v2314 = vpop.f32.mrb[0].mxu0
      %2315 = vmatprep.mubr.f32.mxu0 0.0
      %v2316 = vand.u32 %v1548, 4294901760
      %v2317 = vsub.f32 %v1548, %v2316
      %v2318 = vand.u32 %v2317, 4294901760
      %2319 = vmatmul.mubr.f32.gmra.mrb[0].mxu0 %v2318
      %v2320 = vpop.f32.mrb[0].mxu0
      %v2321 = vadd.f32 %v2126, %v2320
      %v2322 = vpop.f32.mrb[0].mxu0
      %2323 = vdwg.mxu0
      %2324 = vmatprep.subr.mxu0 0.0
      %v2325 = vand.u32 %v1492, 4294901760
      %v2326 = vsub.f32 %v1492, %v2325
      %v2327 = vand.u32 %v2326, 4294901760
      %2328 = vmatpush1.msra.mxu0 %v2327
      %2329 = vmatprep.subr.mxu0 0.0
      %v2330 = vand.u32 %v1493, 4294901760
      %v2331 = vsub.f32 %v1493, %v2330
      %v2332 = vand.u32 %v2331, 4294901760
      %2333 = vmatpush1.msra.mxu0 %v2332
      %2334 = vmatprep.subr.mxu0 0.0
      %2335 = vmatpush1.msra.mxu0 0.0
      %2336 = vmatprep.subr.mxu0 0.0
      %2337 = vmatpush1.msra.mxu0 0.0
      %2338 = vmatprep.subr.mxu0 0.0
      %2339 = vmatpush1.msra.mxu0 0.0
      %2340 = vmatprep.subr.mxu0 0.0
      %2341 = vmatpush1.msra.mxu0 0.0
      %2342 = vmatprep.subr.mxu0 0.0
      %2343 = vmatpush1.msra.mxu0 0.0
      %2344 = vmatprep.subr.mxu0 0.0
      %2345 = vmatpush1.msra.mxu0 0.0
      %2346 = vmatprep.subr.mxu0 0.0
      %2347 = vmatpush1.msra.mxu0 0.0
      %2348 = vmatprep.subr.mxu0 0.0
      %2349 = vmatpush1.msra.mxu0 0.0
      %2350 = vmatprep.subr.mxu0 0.0
      %2351 = vmatpush1.msra.mxu0 0.0
      %2352 = vmatprep.subr.mxu0 0.0
      %2353 = vmatpush1.msra.mxu0 0.0
      %2354 = vmatprep.subr.mxu0 0.0
      %2355 = vmatpush1.msra.mxu0 0.0
      %2356 = vmatprep.subr.mxu0 0.0
      %2357 = vmatpush1.msra.mxu0 0.0
      %2358 = vmatprep.subr.mxu0 0.0
      %2359 = vmatpush1.msra.mxu0 0.0
      %2360 = vmatprep.subr.mxu0 0.0
      %2361 = vmatpush1.msra.mxu0 0.0
      %2362 = vmatprep.subr.mxu0 0.0
      %2363 = vmatpush1.msra.mxu0 0.0
      %2364 = vmatprep.subr.mxu0 0.0
      %2365 = vmatpush1.msra.mxu0 0.0
      %2366 = vmatprep.subr.mxu0 0.0
      %2367 = vmatpush1.msra.mxu0 0.0
      %2368 = vmatprep.subr.mxu0 0.0
      %2369 = vmatpush1.msra.mxu0 0.0
      %2370 = vmatprep.subr.mxu0 0.0
      %2371 = vmatpush1.msra.mxu0 0.0
      %2372 = vmatprep.subr.mxu0 0.0
      %2373 = vmatpush1.msra.mxu0 0.0
      %2374 = vmatprep.subr.mxu0 0.0
      %2375 = vmatpush1.msra.mxu0 0.0
      %2376 = vmatprep.subr.mxu0 0.0
      %2377 = vmatpush1.msra.mxu0 0.0
      %2378 = vmatprep.subr.mxu0 0.0
      %2379 = vmatpush1.msra.mxu0 0.0
      %2380 = vmatprep.subr.mxu0 0.0
      %2381 = vmatpush1.msra.mxu0 0.0
      %2382 = vmatprep.subr.mxu0 0.0
      %2383 = vmatpush1.msra.mxu0 0.0
      %2384 = vmatprep.subr.mxu0 0.0
      %2385 = vmatpush1.msra.mxu0 0.0
      %2386 = vmatprep.subr.mxu0 0.0
      %2387 = vmatpush1.msra.mxu0 0.0
      %2388 = vmatprep.subr.mxu0 0.0
      %2389 = vmatpush1.msra.mxu0 0.0
      %2390 = vmatprep.subr.mxu0 0.0
      %2391 = vmatpush1.msra.mxu0 0.0
      %2392 = vmatprep.subr.mxu0 0.0
      %2393 = vmatpush1.msra.mxu0 0.0
      %2394 = vmatprep.mubr.f32.mxu0 0.0
      %v2395 = vand.u32 %v1503, 4294901760
      %2396 = vmatmul.mubr.f32.gmra.mrb[0].mxu0 %v2395
      %v2397 = vpop.f32.mrb[0].mxu0
      %v2398 = vadd.f32 %v2201, %v2397
      %v2399 = vpop.f32.mrb[0].mxu0
      %2400 = vmatprep.mubr.f32.mxu0 0.0
      %v2401 = vand.u32 %v1506, 4294901760
      %2402 = vmatmul.mubr.f32.gmra.mrb[0].mxu0 %v2401
      %v2403 = vpop.f32.mrb[0].mxu0
      %v2404 = vadd.f32 %v2209, %v2403
      %v2405 = vpop.f32.mrb[0].mxu0
      %2406 = vmatprep.mubr.f32.mxu0 0.0
      %v2407 = vand.u32 %v1509, 4294901760
      %2408 = vmatmul.mubr.f32.gmra.mrb[0].mxu0 %v2407
      %v2409 = vpop.f32.mrb[0].mxu0
      %v2410 = vadd.f32 %v2217, %v2409
      %v2411 = vpop.f32.mrb[0].mxu0
      %2412 = vmatprep.mubr.f32.mxu0 0.0
      %v2413 = vand.u32 %v1512, 4294901760
      %2414 = vmatmul.mubr.f32.gmra.mrb[0].mxu0 %v2413
      %v2415 = vpop.f32.mrb[0].mxu0
      %v2416 = vadd.f32 %v2225, %v2415
      %v2417 = vpop.f32.mrb[0].mxu0
      %2418 = vmatprep.mubr.f32.mxu0 0.0
      %v2419 = vand.u32 %v1515, 4294901760
      %2420 = vmatmul.mubr.f32.gmra.mrb[0].mxu0 %v2419
      %v2421 = vpop.f32.mrb[0].mxu0
      %v2422 = vadd.f32 %v2233, %v2421
      %v2423 = vpop.f32.mrb[0].mxu0
      %2424 = vmatprep.mubr.f32.mxu0 0.0
      %v2425 = vand.u32 %v1518, 4294901760
      %2426 = vmatmul.mubr.f32.gmra.mrb[0].mxu0 %v2425
      %v2427 = vpop.f32.mrb[0].mxu0
      %v2428 = vadd.f32 %v2241, %v2427
      %v2429 = vpop.f32.mrb[0].mxu0
      %2430 = vmatprep.mubr.f32.mxu0 0.0
      %v2431 = vand.u32 %v1521, 4294901760
      %2432 = vmatmul.mubr.f32.gmra.mrb[0].mxu0 %v2431
      %v2433 = vpop.f32.mrb[0].mxu0
      %v2434 = vadd.f32 %v2249, %v2433
      %v2435 = vpop.f32.mrb[0].mxu0
      %2436 = vmatprep.mubr.f32.mxu0 0.0
      %v2437 = vand.u32 %v1524, 4294901760
      %2438 = vmatmul.mubr.f32.gmra.mrb[0].mxu0 %v2437
      %v2439 = vpop.f32.mrb[0].mxu0
      %v2440 = vadd.f32 %v2257, %v2439
      %v2441 = vpop.f32.mrb[0].mxu0
      %2442 = vmatprep.mubr.f32.mxu0 0.0
      %v2443 = vand.u32 %v1527, 4294901760
      %2444 = vmatmul.mubr.f32.gmra.mrb[0].mxu0 %v2443
      %v2445 = vpop.f32.mrb[0].mxu0
      %v2446 = vadd.f32 %v2265, %v2445
      %v2447 = vpop.f32.mrb[0].mxu0
      %2448 = vmatprep.mubr.f32.mxu0 0.0
      %v2449 = vand.u32 %v1530, 4294901760
      %2450 = vmatmul.mubr.f32.gmra.mrb[0].mxu0 %v2449
      %v2451 = vpop.f32.mrb[0].mxu0
      %v2452 = vadd.f32 %v2273, %v2451
      %v2453 = vpop.f32.mrb[0].mxu0
      %2454 = vmatprep.mubr.f32.mxu0 0.0
      %v2455 = vand.u32 %v1533, 4294901760
      %2456 = vmatmul.mubr.f32.gmra.mrb[0].mxu0 %v2455
      %v2457 = vpop.f32.mrb[0].mxu0
      %v2458 = vadd.f32 %v2281, %v2457
      %v2459 = vpop.f32.mrb[0].mxu0
      %2460 = vmatprep.mubr.f32.mxu0 0.0
      %v2461 = vand.u32 %v1536, 4294901760
      %2462 = vmatmul.mubr.f32.gmra.mrb[0].mxu0 %v2461
      %v2463 = vpop.f32.mrb[0].mxu0
      %v2464 = vadd.f32 %v2289, %v2463
      %v2465 = vpop.f32.mrb[0].mxu0
      %2466 = vmatprep.mubr.f32.mxu0 0.0
      %v2467 = vand.u32 %v1539, 4294901760
      %2468 = vmatmul.mubr.f32.gmra.mrb[0].mxu0 %v2467
      %v2469 = vpop.f32.mrb[0].mxu0
      %v2470 = vadd.f32 %v2297, %v2469
      %v2471 = vpop.f32.mrb[0].mxu0
      %2472 = vmatprep.mubr.f32.mxu0 0.0
      %v2473 = vand.u32 %v1542, 4294901760
      %2474 = vmatmul.mubr.f32.gmra.mrb[0].mxu0 %v2473
      %v2475 = vpop.f32.mrb[0].mxu0
      %v2476 = vadd.f32 %v2305, %v2475
      %v2477 = vpop.f32.mrb[0].mxu0
      %2478 = vmatprep.mubr.f32.mxu0 0.0
      %v2479 = vand.u32 %v1545, 4294901760
      %2480 = vmatmul.mubr.f32.gmra.mrb[0].mxu0 %v2479
      %v2481 = vpop.f32.mrb[0].mxu0
      %v2482 = vadd.f32 %v2313, %v2481
      %v2483 = vpop.f32.mrb[0].mxu0
      %2484 = vmatprep.mubr.f32.mxu0 0.0
      %v2485 = vand.u32 %v1548, 4294901760
      %2486 = vmatmul.mubr.f32.gmra.mrb[0].mxu0 %v2485
      %v2487 = vpop.f32.mrb[0].mxu0
      %v2488 = vadd.f32 %v2321, %v2487
      %v2489 = vpop.f32.mrb[0].mxu0
      %2490 = vdwg.mxu0
      %2491 = vmatprep.subr.mxu0 0.0
      %v2492 = vand.u32 %v1492, 4294901760
      %2493 = vmatpush1.msra.mxu0 %v2492
      %2494 = vmatprep.subr.mxu0 0.0
      %v2495 = vand.u32 %v1493, 4294901760
      %2496 = vmatpush1.msra.mxu0 %v2495
      %2497 = vmatprep.subr.mxu0 0.0
      %2498 = vmatpush1.msra.mxu0 0.0
      %2499 = vmatprep.subr.mxu0 0.0
      %2500 = vmatpush1.msra.mxu0 0.0
      %2501 = vmatprep.subr.mxu0 0.0
      %2502 = vmatpush1.msra.mxu0 0.0
      %2503 = vmatprep.subr.mxu0 0.0
      %2504 = vmatpush1.msra.mxu0 0.0
      %2505 = vmatprep.subr.mxu0 0.0
      %2506 = vmatpush1.msra.mxu0 0.0
      %2507 = vmatprep.subr.mxu0 0.0
      %2508 = vmatpush1.msra.mxu0 0.0
      %2509 = vmatprep.subr.mxu0 0.0
      %2510 = vmatpush1.msra.mxu0 0.0
      %2511 = vmatprep.subr.mxu0 0.0
      %2512 = vmatpush1.msra.mxu0 0.0
      %2513 = vmatprep.subr.mxu0 0.0
      %2514 = vmatpush1.msra.mxu0 0.0
      %2515 = vmatprep.subr.mxu0 0.0
      %2516 = vmatpush1.msra.mxu0 0.0
      %2517 = vmatprep.subr.mxu0 0.0
      %2518 = vmatpush1.msra.mxu0 0.0
      %2519 = vmatprep.subr.mxu0 0.0
      %2520 = vmatpush1.msra.mxu0 0.0
      %2521 = vmatprep.subr.mxu0 0.0
      %2522 = vmatpush1.msra.mxu0 0.0
      %2523 = vmatprep.subr.mxu0 0.0
      %2524 = vmatpush1.msra.mxu0 0.0
      %2525 = vmatprep.subr.mxu0 0.0
      %2526 = vmatpush1.msra.mxu0 0.0
      %2527 = vmatprep.subr.mxu0 0.0
      %2528 = vmatpush1.msra.mxu0 0.0
      %2529 = vmatprep.subr.mxu0 0.0
      %2530 = vmatpush1.msra.mxu0 0.0
      %2531 = vmatprep.subr.mxu0 0.0
      %2532 = vmatpush1.msra.mxu0 0.0
      %2533 = vmatprep.subr.mxu0 0.0
      %2534 = vmatpush1.msra.mxu0 0.0
      %2535 = vmatprep.subr.mxu0 0.0
      %2536 = vmatpush1.msra.mxu0 0.0
      %2537 = vmatprep.subr.mxu0 0.0
      %2538 = vmatpush1.msra.mxu0 0.0
      %2539 = vmatprep.subr.mxu0 0.0
      %2540 = vmatpush1.msra.mxu0 0.0
      %2541 = vmatprep.subr.mxu0 0.0
      %2542 = vmatpush1.msra.mxu0 0.0
      %2543 = vmatprep.subr.mxu0 0.0
      %2544 = vmatpush1.msra.mxu0 0.0
      %2545 = vmatprep.subr.mxu0 0.0
      %2546 = vmatpush1.msra.mxu0 0.0
      %2547 = vmatprep.subr.mxu0 0.0
      %2548 = vmatpush1.msra.mxu0 0.0
      %2549 = vmatprep.subr.mxu0 0.0
      %2550 = vmatpush1.msra.mxu0 0.0
      %2551 = vmatprep.subr.mxu0 0.0
      %2552 = vmatpush1.msra.mxu0 0.0
      %2553 = vmatprep.subr.mxu0 0.0
      %2554 = vmatpush1.msra.mxu0 0.0
      %2555 = vmatprep.subr.mxu0 0.0
      %2556 = vmatpush1.msra.mxu0 0.0
      %2557 = vmatprep.mubr.f32.mxu0 0.0
      %v2558 = vand.u32 %v1503, 4294901760
      %2559 = vmatmul.mubr.f32.gmra.mrb[0].mxu0 %v2558
      %v2560 = vpop.f32.mrb[0].mxu0
      %v2561 = vadd.f32 %v2398, %v2560
      %v2562 = vpop.f32.mrb[0].mxu0
      %2563 = vmatprep.mubr.f32.mxu0 0.0
      %v2564 = vand.u32 %v1506, 4294901760
      %2565 = vmatmul.mubr.f32.gmra.mrb[0].mxu0 %v2564
      %v2566 = vpop.f32.mrb[0].mxu0
      %v2567 = vadd.f32 %v2404, %v2566
      %v2568 = vpop.f32.mrb[0].mxu0
      %2569 = vmatprep.mubr.f32.mxu0 0.0
      %v2570 = vand.u32 %v1509, 4294901760
      %2571 = vmatmul.mubr.f32.gmra.mrb[0].mxu0 %v2570
      %v2572 = vpop.f32.mrb[0].mxu0
      %v2573 = vadd.f32 %v2410, %v2572
      %v2574 = vpop.f32.mrb[0].mxu0
      %2575 = vmatprep.mubr.f32.mxu0 0.0
      %v2576 = vand.u32 %v1512, 4294901760
      %2577 = vmatmul.mubr.f32.gmra.mrb[0].mxu0 %v2576
      %v2578 = vpop.f32.mrb[0].mxu0
      %v2579 = vadd.f32 %v2416, %v2578
      %v2580 = vpop.f32.mrb[0].mxu0
      %2581 = vmatprep.mubr.f32.mxu0 0.0
      %v2582 = vand.u32 %v1515, 4294901760
      %2583 = vmatmul.mubr.f32.gmra.mrb[0].mxu0 %v2582
      %v2584 = vpop.f32.mrb[0].mxu0
      %v2585 = vadd.f32 %v2422, %v2584
      %v2586 = vpop.f32.mrb[0].mxu0
      %2587 = vmatprep.mubr.f32.mxu0 0.0
      %v2588 = vand.u32 %v1518, 4294901760
      %2589 = vmatmul.mubr.f32.gmra.mrb[0].mxu0 %v2588
      %v2590 = vpop.f32.mrb[0].mxu0
      %v2591 = vadd.f32 %v2428, %v2590
      %v2592 = vpop.f32.mrb[0].mxu0
      %2593 = vmatprep.mubr.f32.mxu0 0.0
      %v2594 = vand.u32 %v1521, 4294901760
      %2595 = vmatmul.mubr.f32.gmra.mrb[0].mxu0 %v2594
      %v2596 = vpop.f32.mrb[0].mxu0
      %v2597 = vadd.f32 %v2434, %v2596
      %v2598 = vpop.f32.mrb[0].mxu0
      %2599 = vmatprep.mubr.f32.mxu0 0.0
      %v2600 = vand.u32 %v1524, 4294901760
      %2601 = vmatmul.mubr.f32.gmra.mrb[0].mxu0 %v2600
      %v2602 = vpop.f32.mrb[0].mxu0
      %v2603 = vadd.f32 %v2440, %v2602
      %v2604 = vpop.f32.mrb[0].mxu0
      %2605 = vmatprep.mubr.f32.mxu0 0.0
      %v2606 = vand.u32 %v1527, 4294901760
      %2607 = vmatmul.mubr.f32.gmra.mrb[0].mxu0 %v2606
      %v2608 = vpop.f32.mrb[0].mxu0
      %v2609 = vadd.f32 %v2446, %v2608
      %v2610 = vpop.f32.mrb[0].mxu0
      %2611 = vmatprep.mubr.f32.mxu0 0.0
      %v2612 = vand.u32 %v1530, 4294901760
      %2613 = vmatmul.mubr.f32.gmra.mrb[0].mxu0 %v2612
      %v2614 = vpop.f32.mrb[0].mxu0
      %v2615 = vadd.f32 %v2452, %v2614
      %v2616 = vpop.f32.mrb[0].mxu0
      %2617 = vmatprep.mubr.f32.mxu0 0.0
      %v2618 = vand.u32 %v1533, 4294901760
      %2619 = vmatmul.mubr.f32.gmra.mrb[0].mxu0 %v2618
      %v2620 = vpop.f32.mrb[0].mxu0
      %v2621 = vadd.f32 %v2458, %v2620
      %v2622 = vpop.f32.mrb[0].mxu0
      %2623 = vmatprep.mubr.f32.mxu0 0.0
      %v2624 = vand.u32 %v1536, 4294901760
      %2625 = vmatmul.mubr.f32.gmra.mrb[0].mxu0 %v2624
      %v2626 = vpop.f32.mrb[0].mxu0
      %v2627 = vadd.f32 %v2464, %v2626
      %v2628 = vpop.f32.mrb[0].mxu0
      %2629 = vmatprep.mubr.f32.mxu0 0.0
      %v2630 = vand.u32 %v1539, 4294901760
      %2631 = vmatmul.mubr.f32.gmra.mrb[0].mxu0 %v2630
      %v2632 = vpop.f32.mrb[0].mxu0
      %v2633 = vadd.f32 %v2470, %v2632
      %v2634 = vpop.f32.mrb[0].mxu0
      %2635 = vmatprep.mubr.f32.mxu0 0.0
      %v2636 = vand.u32 %v1542, 4294901760
      %2637 = vmatmul.mubr.f32.gmra.mrb[0].mxu0 %v2636
      %v2638 = vpop.f32.mrb[0].mxu0
      %v2639 = vadd.f32 %v2476, %v2638
      %v2640 = vpop.f32.mrb[0].mxu0
      %2641 = vmatprep.mubr.f32.mxu0 0.0
      %v2642 = vand.u32 %v1545, 4294901760
      %2643 = vmatmul.mubr.f32.gmra.mrb[0].mxu0 %v2642
      %v2644 = vpop.f32.mrb[0].mxu0
      %v2645 = vadd.f32 %v2482, %v2644
      %v2646 = vpop.f32.mrb[0].mxu0
      %2647 = vmatprep.mubr.f32.mxu0 0.0
      %v2648 = vand.u32 %v1548, 4294901760
      %2649 = vmatmul.mubr.f32.gmra.mrb[0].mxu0 %v2648
      %v2650 = vpop.f32.mrb[0].mxu0
      %v2651 = vadd.f32 %v2488, %v2650
      %v2652 = vpop.f32.mrb[0].mxu0
      %2653 = vdwg.mxu0
      %vm2654 = vcmask 23552
      %v2655 = vsel %vm2654, %v2561, -inf
      %2656 = vmax.xlane.f32.xlu0 %v2655
      %v2657 = vpop.xlane.xlu0 %2656
      %v2658 = vsel %vm2654, %v2567, -inf
      %2659 = vmax.xlane.f32.xlu0 %v2658
      %v2660 = vpop.xlane.xlu0 %2659
      %v2661 = vsel %vm2654, %v2573, -inf
      %2662 = vmax.xlane.f32.xlu0 %v2661
      %v2663 = vpop.xlane.xlu0 %2662
      %v2664 = vsel %vm2654, %v2579, -inf
      %2665 = vmax.xlane.f32.xlu0 %v2664
      %v2666 = vpop.xlane.xlu0 %2665
      %v2667 = vsel %vm2654, %v2585, -inf
      %2668 = vmax.xlane.f32.xlu0 %v2667
      %v2669 = vpop.xlane.xlu0 %2668
      %v2670 = vsel %vm2654, %v2591, -inf
      %2671 = vmax.xlane.f32.xlu0 %v2670
      %v2672 = vpop.xlane.xlu0 %2671
      %v2673 = vsel %vm2654, %v2597, -inf
      %2674 = vmax.xlane.f32.xlu0 %v2673
      %v2675 = vpop.xlane.xlu0 %2674
      %v2676 = vsel %vm2654, %v2603, -inf
      %2677 = vmax.xlane.f32.xlu0 %v2676
      %v2678 = vpop.xlane.xlu0 %2677
      %v2679 = vsel %vm2654, %v2609, -inf
      %2680 = vmax.xlane.f32.xlu0 %v2679
      %v2681 = vpop.xlane.xlu0 %2680
      %v2682 = vsel %vm2654, %v2615, -inf
      %2683 = vmax.xlane.f32.xlu0 %v2682
      %v2684 = vpop.xlane.xlu0 %2683
      %v2685 = vsel %vm2654, %v2621, -inf
      %2686 = vmax.xlane.f32.xlu0 %v2685
      %v2687 = vpop.xlane.xlu0 %2686
      %v2688 = vsel %vm2654, %v2627, -inf
      %2689 = vmax.xlane.f32.xlu0 %v2688
      %v2690 = vpop.xlane.xlu0 %2689
      %v2691 = vsel %vm2654, %v2633, -inf
      %2692 = vmax.xlane.f32.xlu0 %v2691
      %v2693 = vpop.xlane.xlu0 %2692
      %v2694 = vsel %vm2654, %v2639, -inf
      %2695 = vmax.xlane.f32.xlu0 %v2694
      %v2696 = vpop.xlane.xlu0 %2695
      %v2697 = vsel %vm2654, %v2645, -inf
      %2698 = vmax.xlane.f32.xlu0 %v2697
      %v2699 = vpop.xlane.xlu0 %2698
      %v2700 = vsel %vm2654, %v2651, -inf
      %2701 = vmax.xlane.f32.xlu0 %v2700
      %v2702 = vpop.xlane.xlu0 %2701
      %v2703 = vsub.f32 %v2561, %v2657
      %v2704 = vsub.f32 %v2567, %v2660
      %v2705 = vsub.f32 %v2573, %v2663
      %v2706 = vsub.f32 %v2579, %v2666
      %v2707 = vsub.f32 %v2585, %v2669
      %v2708 = vsub.f32 %v2591, %v2672
      %v2709 = vsub.f32 %v2597, %v2675
      %v2710 = vsub.f32 %v2603, %v2678
      %v2711 = vsub.f32 %v2609, %v2681
      %v2712 = vsub.f32 %v2615, %v2684
      %v2713 = vsub.f32 %v2621, %v2687
      %v2714 = vsub.f32 %v2627, %v2690
      %v2715 = vsub.f32 %v2633, %v2693
      %v2716 = vsub.f32 %v2639, %v2696
      %v2717 = vsub.f32 %v2645, %v2699
      %v2718 = vsub.f32 %v2651, %v2702
      %v2719 = vmul.f32 %v2703, 1.442695
      %v2720 = vpow.pop %v2719
      %v2721 = vmul.f32 %v2704, 1.442695
      %v2722 = vpow.pop %v2721
      %v2723 = vmul.f32 %v2705, 1.442695
      %v2724 = vpow.pop %v2723
      %v2725 = vmul.f32 %v2706, 1.442695
      %v2726 = vpow.pop %v2725
      %v2727 = vmul.f32 %v2707, 1.442695
      %v2728 = vpow.pop %v2727
      %v2729 = vmul.f32 %v2708, 1.442695
      %v2730 = vpow.pop %v2729
      %v2731 = vmul.f32 %v2709, 1.442695
      %v2732 = vpow.pop %v2731
      %v2733 = vmul.f32 %v2710, 1.442695
      %v2734 = vpow.pop %v2733
      %v2735 = vmul.f32 %v2711, 1.442695
      %v2736 = vpow.pop %v2735
      %v2737 = vmul.f32 %v2712, 1.442695
      %v2738 = vpow.pop %v2737
      %v2739 = vmul.f32 %v2713, 1.442695
      %v2740 = vpow.pop %v2739
      %v2741 = vmul.f32 %v2714, 1.442695
      %v2742 = vpow.pop %v2741
      %v2743 = vmul.f32 %v2715, 1.442695
      %v2744 = vpow.pop %v2743
      %v2745 = vmul.f32 %v2716, 1.442695
      %v2746 = vpow.pop %v2745
      %v2747 = vmul.f32 %v2717, 1.442695
      %v2748 = vpow.pop %v2747
      %v2749 = vmul.f32 %v2718, 1.442695
      %v2750 = vpow.pop %v2749
      %v2751 = vsel %vm2654, %v2720, 0.0
      %2752 = vadd.xlane.f32.xlu0 %v2751
      %v2753 = vpop.xlane.xlu0 %2752
      %v2754 = vsel %vm2654, %v2722, 0.0
      %2755 = vadd.xlane.f32.xlu0 %v2754
      %v2756 = vpop.xlane.xlu0 %2755
      %v2757 = vsel %vm2654, %v2724, 0.0
      %2758 = vadd.xlane.f32.xlu0 %v2757
      %v2759 = vpop.xlane.xlu0 %2758
      %v2760 = vsel %vm2654, %v2726, 0.0
      %2761 = vadd.xlane.f32.xlu0 %v2760
      %v2762 = vpop.xlane.xlu0 %2761
      %v2763 = vsel %vm2654, %v2728, 0.0
      %2764 = vadd.xlane.f32.xlu0 %v2763
      %v2765 = vpop.xlane.xlu0 %2764
      %v2766 = vsel %vm2654, %v2730, 0.0
      %2767 = vadd.xlane.f32.xlu0 %v2766
      %v2768 = vpop.xlane.xlu0 %2767
      %v2769 = vsel %vm2654, %v2732, 0.0
      %2770 = vadd.xlane.f32.xlu0 %v2769
      %v2771 = vpop.xlane.xlu0 %2770
      %v2772 = vsel %vm2654, %v2734, 0.0
      %2773 = vadd.xlane.f32.xlu0 %v2772
      %v2774 = vpop.xlane.xlu0 %2773
      %v2775 = vsel %vm2654, %v2736, 0.0
      %2776 = vadd.xlane.f32.xlu0 %v2775
      %v2777 = vpop.xlane.xlu0 %2776
      %v2778 = vsel %vm2654, %v2738, 0.0
      %2779 = vadd.xlane.f32.xlu0 %v2778
      %v2780 = vpop.xlane.xlu0 %2779
      %v2781 = vsel %vm2654, %v2740, 0.0
      %2782 = vadd.xlane.f32.xlu0 %v2781
      %v2783 = vpop.xlane.xlu0 %2782
      %v2784 = vsel %vm2654, %v2742, 0.0
      %2785 = vadd.xlane.f32.xlu0 %v2784
      %v2786 = vpop.xlane.xlu0 %2785
      %v2787 = vsel %vm2654, %v2744, 0.0
      %2788 = vadd.xlane.f32.xlu0 %v2787
      %v2789 = vpop.xlane.xlu0 %2788
      %v2790 = vsel %vm2654, %v2746, 0.0
      %2791 = vadd.xlane.f32.xlu0 %v2790
      %v2792 = vpop.xlane.xlu0 %2791
      %v2793 = vsel %vm2654, %v2748, 0.0
      %2794 = vadd.xlane.f32.xlu0 %v2793
      %v2795 = vpop.xlane.xlu0 %2794
      %v2796 = vsel %vm2654, %v2750, 0.0
      %2797 = vadd.xlane.f32.xlu0 %v2796
      %v2798 = vpop.xlane.xlu0 %2797
      %v2799 = vrcp.pop %v2753
      %v2800 = vmul.f32 %v2720, %v2799
      %v2801 = vrcp.pop %v2756
      %v2802 = vmul.f32 %v2722, %v2801
      %v2803 = vrcp.pop %v2759
      %v2804 = vmul.f32 %v2724, %v2803
      %v2805 = vrcp.pop %v2762
      %v2806 = vmul.f32 %v2726, %v2805
      %v2807 = vrcp.pop %v2765
      %v2808 = vmul.f32 %v2728, %v2807
      %v2809 = vrcp.pop %v2768
      %v2810 = vmul.f32 %v2730, %v2809
      %v2811 = vrcp.pop %v2771
      %v2812 = vmul.f32 %v2732, %v2811
      %v2813 = vrcp.pop %v2774
      %v2814 = vmul.f32 %v2734, %v2813
      %v2815 = vrcp.pop %v2777
      %v2816 = vmul.f32 %v2736, %v2815
      %v2817 = vrcp.pop %v2780
      %v2818 = vmul.f32 %v2738, %v2817
      %v2819 = vrcp.pop %v2783
      %v2820 = vmul.f32 %v2740, %v2819
      %v2821 = vrcp.pop %v2786
      %v2822 = vmul.f32 %v2742, %v2821
      %v2823 = vrcp.pop %v2789
      %v2824 = vmul.f32 %v2744, %v2823
      %v2825 = vrcp.pop %v2792
      %v2826 = vmul.f32 %v2746, %v2825
      %v2827 = vrcp.pop %v2795
      %v2828 = vmul.f32 %v2748, %v2827
      %v2829 = vrcp.pop %v2798
      %v2830 = vmul.f32 %v2750, %v2829
      %2831 = vst.msk [vmem:[%s226] sm:$0xff] %vm2654, %v2800
      %2832 = vst.msk [vmem:[%s226 + $0x8] sm:$0xff] %vm2654, %v2802
      %2833 = vst.msk [vmem:[%s226 + $0x10] sm:$0xff] %vm2654, %v2804
      %2834 = vst.msk [vmem:[%s226 + $0x18] sm:$0xff] %vm2654, %v2806
      %2835 = vst.msk [vmem:[%s226 + $0x20] sm:$0xff] %vm2654, %v2808
      %2836 = vst.msk [vmem:[%s226 + $0x28] sm:$0xff] %vm2654, %v2810
      %2837 = vst.msk [vmem:[%s226 + $0x30] sm:$0xff] %vm2654, %v2812
      %2838 = vst.msk [vmem:[%s226 + $0x38] sm:$0xff] %vm2654, %v2814
      %2839 = vst.msk [vmem:[%s226 + $0x40] sm:$0xff] %vm2654, %v2816
      %2840 = vst.msk [vmem:[%s226 + $0x48] sm:$0xff] %vm2654, %v2818
      %2841 = vst.msk [vmem:[%s226 + $0x50] sm:$0xff] %vm2654, %v2820
      %2842 = vst.msk [vmem:[%s226 + $0x58] sm:$0xff] %vm2654, %v2822
      %2843 = vst.msk [vmem:[%s226 + $0x60] sm:$0xff] %vm2654, %v2824
      %2844 = vst.msk [vmem:[%s226 + $0x68] sm:$0xff] %vm2654, %v2826
      %2845 = vst.msk [vmem:[%s226 + $0x70] sm:$0xff] %vm2654, %v2828
      %2846 = vst.msk [vmem:[%s226 + $0x78] sm:$0xff] %vm2654, %v2830
      %s2847 = smul.u32 16, %s16
      %p2848 = scmp.lt.s32.totalorder %s2847, 31
      %s2849 = scalar_select %p2848, %s2847, 31
      %s2850 = smul.addr %s2849, 8
      %s2851 = scalar_lea.vmem %s5, %s2850
      // Predicated region
      $region41: #{tpu_custom_call.1} parent=39 // pred_check
        %p2852 = pneg %p144
      $region42: #{tpu_custom_call.1} parent=39 // pred_check_branch
        %2854 = sbr.rel (%p2852) target = $region44
      $region43: #{tpu_custom_call.1} parent=39 // pred_region
        %s2855 = smul.u32 16, %s16
      $region44: #{tpu_custom_call.1} parent=39 // pred_fallthru
        _
    $region40: #{tpu_custom_call.1} parent=5 // pred_fallthru
      _
    %p2856 = scmp.le.s32.totalorder 2, %s11
    // Predicated region
    $region45: #{tpu_custom_call.1} parent=5 // pred_check
      %p2857 = pneg %p2856
    $region46: #{tpu_custom_call.1} parent=5 // pred_check_branch
      %2859 = sbr.rel (%p2857) target = $region48
    $region47: #{tpu_custom_call.1} parent=5 // pred_region
      %s2860 = ssub.s32 %s11, 2
      // Predicated region
      $region49: #{tpu_custom_call.1} parent=47 // pred_check
        %p2861 = pneg %p150
      $region50: #{tpu_custom_call.1} parent=47 // pred_check_branch
        %2863 = sbr.rel (%p2861) target = $region52
      $region51: #{tpu_custom_call.1} parent=47 // pred_region
        %s2864 = smul.u32 16, %s17
        %p2865 = scmp.lt.s32.totalorder %s2864, 31
        %s2866 = scalar_select %p2865, %s2864, 31
        %s2867 = smul.addr %s2866, 8
        %s2868 = scalar_lea.vmem %s5, %s2867
      $region52: #{tpu_custom_call.1} parent=47 // pred_fallthru
        _
    $region48: #{tpu_custom_call.1} parent=5 // pred_fallthru
      _
  $region6: #{tpu_custom_call.1} parent=0 // loop_footer
    %s15 = sadd.s32 1, %s11
  $region7: #{tpu_custom_call.1} parent=0 // loop_footer_branch
    %10 = sbr.rel target = $region3
  $region8: #{tpu_custom_call.1} parent=0 // loop_exit
    _

</llo_original>
